<compile_context>
chip_gen: v6e
topology: v6e:2x2x1
jax: 0.10.0
libtpu: 0.0.40
codegen_flags: <defaults>
</compile_context>

<pallas_src>
import functools

import jax
import jax.numpy as jnp
from jax import lax
from jax.experimental import pallas as pl
from jax.experimental.pallas import tpu as pltpu


def a2e_lstm_kernel(x_ref, wf_ref, bf_ref, whh_ref, out_ref,
                    xg_scr, h_scr, c_scr, *, bp, ts):
    """One S-chunk of the fused Linear + LSTM.

    x_ref   : (TS*Bp, F)   bf16  Wav2Vec2 features, time-major (row = t*Bp + b)
    wf_ref  : (F, 4Hp)     bf16  fused weight  Wmap^T @ Wih^T  (gate order i,f,g,o)
    bf_ref  : (1, 4Hp)     f32   fused bias    b_map @ Wih^T + b_ih + b_hh
    whh_ref : (Hp, 4Hp)    f32   lstm.weight_hh_l0^T, per-gate zero-padded
    out_ref : (TS*Bp, Hp)  f32   LSTM hidden states, time-major
    xg_scr  : (TS*Bp, 4Hp) f32   input-side gate preactivations for this chunk
    h_scr / c_scr : (Bp, Hp) f32 recurrent state carried across S-chunks
    """
    Hp = whh_ref.shape[0]

    @pl.when(pl.program_id(0) == 0)
    def _():
        h_scr[...] = jnp.zeros_like(h_scr)
        c_scr[...] = jnp.zeros_like(c_scr)

    # Dense, trivially parallel stage: a single full-K (F x 4Hp) bf16 MXU matmul for
    # all ts*bp rows of this chunk, f32 accumulate, f32 fused bias.
    # TODO(synk): overlap this with the previous chunk's recurrence (manual xg
    #             double-buffer) and, on v7x, run it on the second TensorCore.
    xg_scr[...] = (jnp.dot(x_ref[...], wf_ref[...],
                           preferred_element_type=jnp.float32) + bf_ref[...])

    # Recurrent weight loaded once per chunk (hoisted off the per-step path).
    # TODO(synk): keep whh resident in the MXU across steps with
    #             pltpu.matmul_push_rhs / matmul_acc_lhs / matmul_pop.
    whh = whh_ref[...]

    def step(t, carry):
        h, c = carry
        row = pl.multiple_of(t * bp, bp)                 # bp == 8 -> sublane-aligned
        gates = xg_scr[pl.ds(row, bp), :] + jnp.dot(
            h, whh, preferred_element_type=jnp.float32)  # (bp, 4Hp)
        i_g = jax.nn.sigmoid(gates[:, 0:Hp])
        f_g = jax.nn.sigmoid(gates[:, Hp:2 * Hp])
        g_g = jnp.tanh(gates[:, 2 * Hp:3 * Hp])
        o_g = jax.nn.sigmoid(gates[:, 3 * Hp:4 * Hp])
        c = f_g * c + i_g * g_g
        h = o_g * jnp.tanh(c)
        # Per-step store sits off the (h, c) carry chain and hides under the next
        # step's matmul; no concat keeping all hidden states live in vregs.
        out_ref[pl.ds(row, bp), :] = h.astype(out_ref.dtype)
        return h, c

    # (h, c) are loop-carried values (vreg-resident), read from / written back to the
    # carry scratch only once per chunk.  ts is small per chunk so full unroll is
    # cheap; at larger chunk sizes switch to a small integer unroll factor.
    h, c = lax.fori_loop(0, ts, step, (h_scr[...], c_scr[...]), unroll=True)
    h_scr[...] = h
    c_scr[...] = c


def audio2expression_lstm(audio_enc, params, *, seq_chunk=4):
    """audio_enc: (B, S, 768) float32 — Wav2Vec2 last_hidden_state."""
    B, S, F = audio_enc.shape
    H = params["b_map"].shape[0]
    Hp = ((H + 127) // 128) * 128          # lane-aligned hidden size
    Bp = ((B + 7) // 8) * 8                # sublane-aligned recurrence batch
    TS = min(seq_chunk, S)                 # timesteps per grid chunk
    Sp = ((S + TS - 1) // TS) * TS         # S padded to a whole number of chunks
    pad_h = Hp - H
    f32 = jnp.float32

    # --- parameter preprocessing (one-time layout plumbing in XLA) ---------------
    # Zero-pad H -> Hp (per gate for the LSTM matrices/biases) so padded lanes of
    # h/c stay exactly 0 through the recurrence and are sliced off afterwards.
    w_map_p = jnp.pad(params["w_map"].astype(f32), ((0, pad_h), (0, 0)))      # (Hp, F)
    b_map_p = jnp.pad(params["b_map"].astype(f32), (0, pad_h))                # (Hp,)
    w_ih_p = jnp.pad(params["w_ih"].astype(f32).reshape(4, H, H),
                     ((0, 0), (0, pad_h), (0, pad_h))).reshape(4 * Hp, Hp)
    w_hh_p = jnp.pad(params["w_hh"].astype(f32).reshape(4, H, H),
                     ((0, 0), (0, pad_h), (0, pad_h))).reshape(4 * Hp, Hp)
    b_ih_p = jnp.pad(params["b_ih"].astype(f32).reshape(4, H),
                     ((0, 0), (0, pad_h))).reshape(4 * Hp)
    b_hh_p = jnp.pad(params["b_hh"].astype(f32).reshape(4, H),
                     ((0, 0), (0, pad_h))).reshape(4 * Hp)

    wih_t = w_ih_p.T                                               # (Hp, 4Hp)
    whh_t = w_hh_p.T                                               # (Hp, 4Hp)
    lstm_bias = (b_ih_p + b_hh_p).reshape(1, 4 * Hp)               # (1, 4Hp)

    # Fuse the audio_feature_map Linear into the LSTM input-gate matmul:
    #   xg = (x @ Wmap^T + b_map) @ Wih^T + b  ==  x @ W_fused + b_fused
    w_fused = (w_map_p.T @ wih_t).astype(jnp.bfloat16)             # (F, 4Hp) bf16
    b_fused = (b_map_p @ wih_t).reshape(1, 4 * Hp) + lstm_bias     # (1, 4Hp) f32

    # Batch-pad to Bp sublanes + time-major flatten so step t reads a contiguous,
    # 8-aligned (Bp, 4Hp) slab of precomputed gate inputs.
    # TODO(synk): at real S, fold this pad/transpose into the kernel's xg write to
    #             avoid an extra HBM round trip of the input.
    x_p = jnp.pad(audio_enc.astype(f32), ((0, Bp - B), (0, Sp - S), (0, 0)))
    x_tm = jnp.swapaxes(x_p, 0, 1).reshape(Sp * Bp, F).astype(jnp.bfloat16)

    num_chunks = Sp // TS
    out_tm = pl.pallas_call(
        functools.partial(a2e_lstm_kernel, bp=Bp, ts=TS),
        out_shape=jax.ShapeDtypeStruct((Sp * Bp, Hp), jnp.float32),
        grid=(num_chunks,),
        in_specs=[
            pl.BlockSpec((TS * Bp, F), lambda c: (c, 0)),          # x chunk (pipelined DMA)
            pl.BlockSpec((F, 4 * Hp), lambda c: (0, 0)),           # W_fused (resident)
            pl.BlockSpec((1, 4 * Hp), lambda c: (0, 0)),           # b_fused
            pl.BlockSpec((Hp, 4 * Hp), lambda c: (0, 0)),          # whh^T
        ],
        out_specs=pl.BlockSpec((TS * Bp, Hp), lambda c: (c, 0)),
        scratch_shapes=[
            pltpu.VMEM((TS * Bp, 4 * Hp), jnp.float32),            # xg chunk
            pltpu.VMEM((Bp, Hp), jnp.float32),                     # h carry
            pltpu.VMEM((Bp, Hp), jnp.float32),                     # c carry
        ],
        # The chunk axis carries (h, c) across grid steps -> sequential.
        compiler_params=pltpu.CompilerParams(
            dimension_semantics=("arbitrary",)),
    )(x_tm, w_fused, b_fused, whh_t)

    # Back to batch-first layout; drop padded timesteps / batch rows / hidden lanes.
    return out_tm.reshape(Sp, Bp, Hp)[:S, :B, :H].swapaxes(0, 1)


def reference_forward(audio_enc, params):
    """Plain-JAX f32 reference matching torch.nn.Linear + torch.nn.LSTM semantics."""
    H = params["b_map"].shape[0]
    proj = audio_enc @ params["w_map"].T + params["b_map"]             # (B, S, H)
    bias = params["b_ih"] + params["b_hh"]

    def cell(carry, x_t):
        h, c = carry
        gates = x_t @ params["w_ih"].T + h @ params["w_hh"].T + bias
        i_g = jax.nn.sigmoid(gates[:, 0:H])
        f_g = jax.nn.sigmoid(gates[:, H:2 * H])
        g_g = jnp.tanh(gates[:, 2 * H:3 * H])
        o_g = jax.nn.sigmoid(gates[:, 3 * H:4 * H])
        c_new = f_g * c + i_g * g_g
        h_new = o_g * jnp.tanh(c_new)
        return (h_new, c_new), h_new

    B = audio_enc.shape[0]
    h0 = jnp.zeros((B, H), jnp.float32)
    c0 = jnp.zeros((B, H), jnp.float32)
    _, ys = lax.scan(cell, (h0, c0), jnp.swapaxes(proj, 0, 1))          # scan over time
    return jnp.swapaxes(ys, 0, 1)                                       # (B, S, H)


if __name__ == "__main__":
    # Small, module-consistent shapes: batch=2, seq=8, wav2vec2 feature dim=768,
    # n_hidden=64 (n_params / fc are unused by the forward pass).
    B, S, F, H = 2, 8, 768, 64

    key = jax.random.PRNGKey(0)
    k_x, k_wm, k_bm, k_wi, k_wh, k_bi, k_bh = jax.random.split(key, 7)

    audio_enc = jax.random.normal(k_x, (B, S, F), jnp.float32)

    params = {
        "w_map": 0.02 * jax.random.normal(k_wm, (H, F), jnp.float32),     # Linear(768, H).weight
        "b_map": 0.01 * jax.random.normal(k_bm, (H,), jnp.float32),       # Linear(768, H).bias
        "w_ih": 0.1 * jax.random.normal(k_wi, (4 * H, H), jnp.float32),   # lstm.weight_ih_l0
        "w_hh": 0.1 * jax.random.normal(k_wh, (4 * H, H), jnp.float32),   # lstm.weight_hh_l0
        "b_ih": 0.05 * jax.random.normal(k_bi, (4 * H,), jnp.float32),    # lstm.bias_ih_l0
        "b_hh": 0.05 * jax.random.normal(k_bh, (4 * H,), jnp.float32),    # lstm.bias_hh_l0
    }

    out = audio2expression_lstm(audio_enc, params)
    out = jax.block_until_ready(out)

    ref = reference_forward(audio_enc, params)
    assert out.shape == (B, S, H)
    # bf16 x / W_fused in the dense stage -> tolerance loosened vs the f32 reference.
    assert jnp.allclose(out, ref, atol=2e-2, rtol=2e-2), "mismatch vs reference"

    print("KERNEL_OK")
</pallas_src>

<mosaic_0001>
module attributes {stable_mosaic.version = 11 : i64} {
  func.func @a2e_lstm_kernel(%arg0: i32, %arg1: memref<32x768xbf16, #tpu.memory_space<vmem>>, %arg2: memref<768x512xbf16, #tpu.memory_space<vmem>>, %arg3: memref<1x512xf32, #tpu.memory_space<vmem>>, %arg4: memref<128x512xf32, #tpu.memory_space<vmem>>, %arg5: memref<32x128xf32, #tpu.memory_space<vmem>>, %arg6: memref<32x512xf32, #tpu.memory_space<vmem>>, %arg7: memref<8x128xf32, #tpu.memory_space<vmem>>, %arg8: memref<8x128xf32, #tpu.memory_space<vmem>>) attributes {dimension_semantics = [#tpu.dimension_semantics<arbitrary>], iteration_bounds = array<i64: 2>, scalar_prefetch = 0 : i64, scratch_operands = 3 : i64, tpu.core_type = #tpu.core_type<tc>, window_params = [{transform_indices = @transform_0, window_bounds = array<i64: 32, 768>}, {pipeline_mode = #tpu.pipeline_mode<synchronous>, transform_indices = @transform_1, window_bounds = array<i64: 768, 512>}, {pipeline_mode = #tpu.pipeline_mode<synchronous>, transform_indices = @transform_2, window_bounds = array<i64: 1, 512>}, {pipeline_mode = #tpu.pipeline_mode<synchronous>, transform_indices = @transform_3, window_bounds = array<i64: 128, 512>}, {transform_indices = @transform_4, window_bounds = array<i64: 32, 128>}]} {
    %c0_i32 = arith.constant 0 : i32
    %0 = arith.cmpi eq, %arg0, %c0_i32 : i32
    %1 = arith.extui %0 : i1 to i32
    %c0_i32_0 = arith.constant 0 : i32
    %2 = arith.cmpi ne, %1, %c0_i32_0 : i32
    scf.if %2 {
      %cst_46 = arith.constant 0.000000e+00 : f32
      %147 = vector.broadcast %cst_46 : f32 to vector<8x128xf32>
      %c0_47 = arith.constant 0 : index
      %c0_48 = arith.constant 0 : index
      %148 = vector.load %arg7[%c0_47, %c0_48] : memref<8x128xf32, #tpu.memory_space<vmem>>, vector<8x128xf32>
      tpu.vector_store %arg7[%c0_47, %c0_48], %147 {strides = array<i32>} : memref<8x128xf32, #tpu.memory_space<vmem>>, vector<8x128xf32>,
      %cst_49 = arith.constant 0.000000e+00 : f32
      %149 = vector.broadcast %cst_49 : f32 to vector<8x128xf32>
      %c0_50 = arith.constant 0 : index
      %c0_51 = arith.constant 0 : index
      %150 = vector.load %arg8[%c0_50, %c0_51] : memref<8x128xf32, #tpu.memory_space<vmem>>, vector<8x128xf32>
      tpu.vector_store %arg8[%c0_50, %c0_51], %149 {strides = array<i32>} : memref<8x128xf32, #tpu.memory_space<vmem>>, vector<8x128xf32>,
    } else {
    }
    %c0 = arith.constant 0 : index
    %c0_1 = arith.constant 0 : index
    %3 = vector.load %arg1[%c0, %c0_1] : memref<32x768xbf16, #tpu.memory_space<vmem>>, vector<32x768xbf16>
    %c0_2 = arith.constant 0 : index
    %c0_3 = arith.constant 0 : index
    %4 = vector.load %arg2[%c0_2, %c0_3] : memref<768x512xbf16, #tpu.memory_space<vmem>>, vector<768x512xbf16>
    %cst = arith.constant dense<0.000000e+00> : vector<32x512xf32>
    %5 = tpu.matmul %3, %4, %cst {dimension_numbers = #tpu.dot_dimension_numbers<[1], [0], [0], [1], [0, 0, 1, 1], [], []>} : vector<32x768xbf16>, vector<768x512xbf16>, vector<32x512xf32> -> vector<32x512xf32>
    %c0_4 = arith.constant 0 : index
    %c0_5 = arith.constant 0 : index
    %6 = vector.load %arg3[%c0_4, %c0_5] : memref<1x512xf32, #tpu.memory_space<vmem>>, vector<1x512xf32>
    %7 = vector.broadcast %6 : vector<1x512xf32> to vector<32x512xf32>
    %8 = arith.addf %5, %7 : vector<32x512xf32>
    %c0_6 = arith.constant 0 : index
    %c0_7 = arith.constant 0 : index
    %9 = vector.load %arg6[%c0_6, %c0_7] : memref<32x512xf32, #tpu.memory_space<vmem>>, vector<32x512xf32>
    tpu.vector_store %arg6[%c0_6, %c0_7], %8 {strides = array<i32>} : memref<32x512xf32, #tpu.memory_space<vmem>>, vector<32x512xf32>,
    %c0_8 = arith.constant 0 : index
    %c0_9 = arith.constant 0 : index
    %10 = vector.load %arg4[%c0_8, %c0_9] : memref<128x512xf32, #tpu.memory_space<vmem>>, vector<128x512xf32>
    %c0_10 = arith.constant 0 : index
    %c0_11 = arith.constant 0 : index
    %11 = vector.load %arg7[%c0_10, %c0_11] : memref<8x128xf32, #tpu.memory_space<vmem>>, vector<8x128xf32>
    %c0_12 = arith.constant 0 : index
    %c0_13 = arith.constant 0 : index
    %12 = vector.load %arg8[%c0_12, %c0_13] : memref<8x128xf32, #tpu.memory_space<vmem>>, vector<8x128xf32>
    %c0_i32_14 = arith.constant 0 : i32
    %c8_i32 = arith.constant 8 : i32
    %13 = arith.muli %c0_i32_14, %c8_i32 : i32
    %14 = tpu.assume_multiple %13, 8 : i32
    %15 = arith.index_cast %14 : i32 to index
    %c0_15 = arith.constant 0 : index
    %16 = vector.load %arg6[%15, %c0_15] : memref<32x512xf32, #tpu.memory_space<vmem>>, vector<8x512xf32>
    %cst_16 = arith.constant dense<0.000000e+00> : vector<8x512xf32>
    %17 = tpu.matmul %11, %10, %cst_16 {dimension_numbers = #tpu.dot_dimension_numbers<[1], [0], [0], [1], [0, 0, 1, 1], [], []>} : vector<8x128xf32>, vector<128x512xf32>, vector<8x512xf32> -> vector<8x512xf32>
    %18 = arith.addf %16, %17 : vector<8x512xf32>
    %19 = vector.extract_strided_slice %18 {offsets = [0, 0], sizes = [8, 128], strides = [1, 1]} : vector<8x512xf32> to vector<8x128xf32>
    %20 = arith.negf %19 : vector<8x128xf32>
    %21 = math.exp %20 : vector<8x128xf32>
    %cst_17 = arith.constant 1.000000e+00 : f32
    %22 = vector.broadcast %cst_17 : f32 to vector<8x128xf32>
    %23 = arith.addf %22, %21 : vector<8x128xf32>
    %24 = arith.divf %22, %23 : vector<8x128xf32>
    %25 = vector.extract_strided_slice %18 {offsets = [0, 128], sizes = [8, 128], strides = [1, 1]} : vector<8x512xf32> to vector<8x128xf32>
    %26 = arith.negf %25 : vector<8x128xf32>
    %27 = math.exp %26 : vector<8x128xf32>
    %cst_18 = arith.constant 1.000000e+00 : f32
    %28 = vector.broadcast %cst_18 : f32 to vector<8x128xf32>
    %29 = arith.addf %28, %27 : vector<8x128xf32>
    %30 = arith.divf %28, %29 : vector<8x128xf32>
    %31 = vector.extract_strided_slice %18 {offsets = [0, 256], sizes = [8, 128], strides = [1, 1]} : vector<8x512xf32> to vector<8x128xf32>
    %32 = math.tanh %31 : vector<8x128xf32>
    %33 = vector.extract_strided_slice %18 {offsets = [0, 384], sizes = [8, 128], strides = [1, 1]} : vector<8x512xf32> to vector<8x128xf32>
    %34 = arith.negf %33 : vector<8x128xf32>
    %35 = math.exp %34 : vector<8x128xf32>
    %cst_19 = arith.constant 1.000000e+00 : f32
    %36 = vector.broadcast %cst_19 : f32 to vector<8x128xf32>
    %37 = arith.addf %36, %35 : vector<8x128xf32>
    %38 = arith.divf %36, %37 : vector<8x128xf32>
    %39 = arith.mulf %30, %12 : vector<8x128xf32>
    %40 = arith.mulf %24, %32 : vector<8x128xf32>
    %41 = arith.addf %39, %40 : vector<8x128xf32>
    %42 = math.tanh %41 : vector<8x128xf32>
    %43 = arith.mulf %38, %42 : vector<8x128xf32>
    %44 = arith.index_cast %14 : i32 to index
    %c0_20 = arith.constant 0 : index
    %45 = vector.load %arg5[%44, %c0_20] : memref<32x128xf32, #tpu.memory_space<vmem>>, vector<8x128xf32>
    tpu.vector_store %arg5[%44, %c0_20], %43 {strides = array<i32>} : memref<32x128xf32, #tpu.memory_space<vmem>>, vector<8x128xf32>,
    %c1_i32 = arith.constant 1 : i32
    %c8_i32_21 = arith.constant 8 : i32
    %46 = arith.muli %c1_i32, %c8_i32_21 : i32
    %47 = tpu.assume_multiple %46, 8 : i32
    %48 = arith.index_cast %47 : i32 to index
    %c0_22 = arith.constant 0 : index
    %49 = vector.load %arg6[%48, %c0_22] : memref<32x512xf32, #tpu.memory_space<vmem>>, vector<8x512xf32>
    %cst_23 = arith.constant dense<0.000000e+00> : vector<8x512xf32>
    %50 = tpu.matmul %43, %10, %cst_23 {dimension_numbers = #tpu.dot_dimension_numbers<[1], [0], [0], [1], [0, 0, 1, 1], [], []>} : vector<8x128xf32>, vector<128x512xf32>, vector<8x512xf32> -> vector<8x512xf32>
    %51 = arith.addf %49, %50 : vector<8x512xf32>
    %52 = vector.extract_strided_slice %51 {offsets = [0, 0], sizes = [8, 128], strides = [1, 1]} : vector<8x512xf32> to vector<8x128xf32>
    %53 = arith.negf %52 : vector<8x128xf32>
    %54 = math.exp %53 : vector<8x128xf32>
    %cst_24 = arith.constant 1.000000e+00 : f32
    %55 = vector.broadcast %cst_24 : f32 to vector<8x128xf32>
    %56 = arith.addf %55, %54 : vector<8x128xf32>
    %57 = arith.divf %55, %56 : vector<8x128xf32>
    %58 = vector.extract_strided_slice %51 {offsets = [0, 128], sizes = [8, 128], strides = [1, 1]} : vector<8x512xf32> to vector<8x128xf32>
    %59 = arith.negf %58 : vector<8x128xf32>
    %60 = math.exp %59 : vector<8x128xf32>
    %cst_25 = arith.constant 1.000000e+00 : f32
    %61 = vector.broadcast %cst_25 : f32 to vector<8x128xf32>
    %62 = arith.addf %61, %60 : vector<8x128xf32>
    %63 = arith.divf %61, %62 : vector<8x128xf32>
    %64 = vector.extract_strided_slice %51 {offsets = [0, 256], sizes = [8, 128], strides = [1, 1]} : vector<8x512xf32> to vector<8x128xf32>
    %65 = math.tanh %64 : vector<8x128xf32>
    %66 = vector.extract_strided_slice %51 {offsets = [0, 384], sizes = [8, 128], strides = [1, 1]} : vector<8x512xf32> to vector<8x128xf32>
    %67 = arith.negf %66 : vector<8x128xf32>
    %68 = math.exp %67 : vector<8x128xf32>
    %cst_26 = arith.constant 1.000000e+00 : f32
    %69 = vector.broadcast %cst_26 : f32 to vector<8x128xf32>
    %70 = arith.addf %69, %68 : vector<8x128xf32>
    %71 = arith.divf %69, %70 : vector<8x128xf32>
    %72 = arith.mulf %63, %41 : vector<8x128xf32>
    %73 = arith.mulf %57, %65 : vector<8x128xf32>
    %74 = arith.addf %72, %73 : vector<8x128xf32>
    %75 = math.tanh %74 : vector<8x128xf32>
    %76 = arith.mulf %71, %75 : vector<8x128xf32>
    %77 = arith.index_cast %47 : i32 to index
    %c0_27 = arith.constant 0 : index
    %78 = vector.load %arg5[%77, %c0_27] : memref<32x128xf32, #tpu.memory_space<vmem>>, vector<8x128xf32>
    tpu.vector_store %arg5[%77, %c0_27], %76 {strides = array<i32>} : memref<32x128xf32, #tpu.memory_space<vmem>>, vector<8x128xf32>,
    %c2_i32 = arith.constant 2 : i32
    %c8_i32_28 = arith.constant 8 : i32
    %79 = arith.muli %c2_i32, %c8_i32_28 : i32
    %80 = tpu.assume_multiple %79, 8 : i32
    %81 = arith.index_cast %80 : i32 to index
    %c0_29 = arith.constant 0 : index
    %82 = vector.load %arg6[%81, %c0_29] : memref<32x512xf32, #tpu.memory_space<vmem>>, vector<8x512xf32>
    %cst_30 = arith.constant dense<0.000000e+00> : vector<8x512xf32>
    %83 = tpu.matmul %76, %10, %cst_30 {dimension_numbers = #tpu.dot_dimension_numbers<[1], [0], [0], [1], [0, 0, 1, 1], [], []>} : vector<8x128xf32>, vector<128x512xf32>, vector<8x512xf32> -> vector<8x512xf32>
    %84 = arith.addf %82, %83 : vector<8x512xf32>
    %85 = vector.extract_strided_slice %84 {offsets = [0, 0], sizes = [8, 128], strides = [1, 1]} : vector<8x512xf32> to vector<8x128xf32>
    %86 = arith.negf %85 : vector<8x128xf32>
    %87 = math.exp %86 : vector<8x128xf32>
    %cst_31 = arith.constant 1.000000e+00 : f32
    %88 = vector.broadcast %cst_31 : f32 to vector<8x128xf32>
    %89 = arith.addf %88, %87 : vector<8x128xf32>
    %90 = arith.divf %88, %89 : vector<8x128xf32>
    %91 = vector.extract_strided_slice %84 {offsets = [0, 128], sizes = [8, 128], strides = [1, 1]} : vector<8x512xf32> to vector<8x128xf32>
    %92 = arith.negf %91 : vector<8x128xf32>
    %93 = math.exp %92 : vector<8x128xf32>
    %cst_32 = arith.constant 1.000000e+00 : f32
    %94 = vector.broadcast %cst_32 : f32 to vector<8x128xf32>
    %95 = arith.addf %94, %93 : vector<8x128xf32>
    %96 = arith.divf %94, %95 : vector<8x128xf32>
    %97 = vector.extract_strided_slice %84 {offsets = [0, 256], sizes = [8, 128], strides = [1, 1]} : vector<8x512xf32> to vector<8x128xf32>
    %98 = math.tanh %97 : vector<8x128xf32>
    %99 = vector.extract_strided_slice %84 {offsets = [0, 384], sizes = [8, 128], strides = [1, 1]} : vector<8x512xf32> to vector<8x128xf32>
    %100 = arith.negf %99 : vector<8x128xf32>
    %101 = math.exp %100 : vector<8x128xf32>
    %cst_33 = arith.constant 1.000000e+00 : f32
    %102 = vector.broadcast %cst_33 : f32 to vector<8x128xf32>
    %103 = arith.addf %102, %101 : vector<8x128xf32>
    %104 = arith.divf %102, %103 : vector<8x128xf32>
    %105 = arith.mulf %96, %74 : vector<8x128xf32>
    %106 = arith.mulf %90, %98 : vector<8x128xf32>
    %107 = arith.addf %105, %106 : vector<8x128xf32>
    %108 = math.tanh %107 : vector<8x128xf32>
    %109 = arith.mulf %104, %108 : vector<8x128xf32>
    %110 = arith.index_cast %80 : i32 to index
    %c0_34 = arith.constant 0 : index
    %111 = vector.load %arg5[%110, %c0_34] : memref<32x128xf32, #tpu.memory_space<vmem>>, vector<8x128xf32>
    tpu.vector_store %arg5[%110, %c0_34], %109 {strides = array<i32>} : memref<32x128xf32, #tpu.memory_space<vmem>>, vector<8x128xf32>,
    %c3_i32 = arith.constant 3 : i32
    %c8_i32_35 = arith.constant 8 : i32
    %112 = arith.muli %c3_i32, %c8_i32_35 : i32
    %113 = tpu.assume_multiple %112, 8 : i32
    %114 = arith.index_cast %113 : i32 to index
    %c0_36 = arith.constant 0 : index
    %115 = vector.load %arg6[%114, %c0_36] : memref<32x512xf32, #tpu.memory_space<vmem>>, vector<8x512xf32>
    %cst_37 = arith.constant dense<0.000000e+00> : vector<8x512xf32>
    %116 = tpu.matmul %109, %10, %cst_37 {dimension_numbers = #tpu.dot_dimension_numbers<[1], [0], [0], [1], [0, 0, 1, 1], [], []>} : vector<8x128xf32>, vector<128x512xf32>, vector<8x512xf32> -> vector<8x512xf32>
    %117 = arith.addf %115, %116 : vector<8x512xf32>
    %118 = vector.extract_strided_slice %117 {offsets = [0, 0], sizes = [8, 128], strides = [1, 1]} : vector<8x512xf32> to vector<8x128xf32>
    %119 = arith.negf %118 : vector<8x128xf32>
    %120 = math.exp %119 : vector<8x128xf32>
    %cst_38 = arith.constant 1.000000e+00 : f32
    %121 = vector.broadcast %cst_38 : f32 to vector<8x128xf32>
    %122 = arith.addf %121, %120 : vector<8x128xf32>
    %123 = arith.divf %121, %122 : vector<8x128xf32>
    %124 = vector.extract_strided_slice %117 {offsets = [0, 128], sizes = [8, 128], strides = [1, 1]} : vector<8x512xf32> to vector<8x128xf32>
    %125 = arith.negf %124 : vector<8x128xf32>
    %126 = math.exp %125 : vector<8x128xf32>
    %cst_39 = arith.constant 1.000000e+00 : f32
    %127 = vector.broadcast %cst_39 : f32 to vector<8x128xf32>
    %128 = arith.addf %127, %126 : vector<8x128xf32>
    %129 = arith.divf %127, %128 : vector<8x128xf32>
    %130 = vector.extract_strided_slice %117 {offsets = [0, 256], sizes = [8, 128], strides = [1, 1]} : vector<8x512xf32> to vector<8x128xf32>
    %131 = math.tanh %130 : vector<8x128xf32>
    %132 = vector.extract_strided_slice %117 {offsets = [0, 384], sizes = [8, 128], strides = [1, 1]} : vector<8x512xf32> to vector<8x128xf32>
    %133 = arith.negf %132 : vector<8x128xf32>
    %134 = math.exp %133 : vector<8x128xf32>
    %cst_40 = arith.constant 1.000000e+00 : f32
    %135 = vector.broadcast %cst_40 : f32 to vector<8x128xf32>
    %136 = arith.addf %135, %134 : vector<8x128xf32>
    %137 = arith.divf %135, %136 : vector<8x128xf32>
    %138 = arith.mulf %129, %107 : vector<8x128xf32>
    %139 = arith.mulf %123, %131 : vector<8x128xf32>
    %140 = arith.addf %138, %139 : vector<8x128xf32>
    %141 = math.tanh %140 : vector<8x128xf32>
    %142 = arith.mulf %137, %141 : vector<8x128xf32>
    %143 = arith.index_cast %113 : i32 to index
    %c0_41 = arith.constant 0 : index
    %144 = vector.load %arg5[%143, %c0_41] : memref<32x128xf32, #tpu.memory_space<vmem>>, vector<8x128xf32>
    tpu.vector_store %arg5[%143, %c0_41], %142 {strides = array<i32>} : memref<32x128xf32, #tpu.memory_space<vmem>>, vector<8x128xf32>,
    %c4_i32 = arith.constant 4 : i32
    %c0_42 = arith.constant 0 : index
    %c0_43 = arith.constant 0 : index
    %145 = vector.load %arg7[%c0_42, %c0_43] : memref<8x128xf32, #tpu.memory_space<vmem>>, vector<8x128xf32>
    tpu.vector_store %arg7[%c0_42, %c0_43], %142 {strides = array<i32>} : memref<8x128xf32, #tpu.memory_space<vmem>>, vector<8x128xf32>,
    %c0_44 = arith.constant 0 : index
    %c0_45 = arith.constant 0 : index
    %146 = vector.load %arg8[%c0_44, %c0_45] : memref<8x128xf32, #tpu.memory_space<vmem>>, vector<8x128xf32>
    tpu.vector_store %arg8[%c0_44, %c0_45], %140 {strides = array<i32>} : memref<8x128xf32, #tpu.memory_space<vmem>>, vector<8x128xf32>,
    return
  }
  func.func @transform_0(%arg0: i32) -> (i32, i32) {
    %c0_i32 = arith.constant 0 : i32
    %c0_i32_0 = arith.constant 0 : i32
    return %arg0, %c0_i32 : i32, i32
  }
  func.func @transform_1(%arg0: i32) -> (i32, i32) {
    %c0_i32 = arith.constant 0 : i32
    %c0_i32_0 = arith.constant 0 : i32
    %c0_i32_1 = arith.constant 0 : i32
    return %c0_i32, %c0_i32_0 : i32, i32
  }
  func.func @transform_2(%arg0: i32) -> (i32, i32) {
    %c0_i32 = arith.constant 0 : i32
    %c0_i32_0 = arith.constant 0 : i32
    %c0_i32_1 = arith.constant 0 : i32
    return %c0_i32, %c0_i32_0 : i32, i32
  }
  func.func @transform_3(%arg0: i32) -> (i32, i32) {
    %c0_i32 = arith.constant 0 : i32
    %c0_i32_0 = arith.constant 0 : i32
    %c0_i32_1 = arith.constant 0 : i32
    return %c0_i32, %c0_i32_0 : i32, i32
  }
  func.func @transform_4(%arg0: i32) -> (i32, i32) {
    %c0_i32 = arith.constant 0 : i32
    %c0_i32_0 = arith.constant 0 : i32
    return %arg0, %c0_i32 : i32, i32
  }
}

</mosaic_0001>

<llo_original>
// kernel: tpu_custom_call.1
$region0: #{tpu_custom_call.1}
  #allocation0 [shape = 'u32[]', space=smem, size = 0x4, offset = 0x4, fixed_abs, tag = 'smem constant byte address 0x4 - core index']
  #allocation1 [shape = 'u32[144,128]{1,0:T(1,128)}', space=vmem, size = 0x12000, scoped, tag = 'internal scratch']
  #allocation2 [shape = 'f32[32,512]{1,0:T(8,128)}', space=vmem, size = 0x10000, scoped, tag = 'scratch operand']
  #allocation3 [shape = 'f32[8,128]{1,0:T(8,128)}', space=vmem, size = 0x1000, scoped, tag = 'scratch operand']
  #allocation4 [shape = 'f32[8,128]{1,0:T(8,128)}', space=vmem, size = 0x1000, scoped, tag = 'scratch operand']
  %s0 = inlined_call_operand.hbm [shape: bf16[64,768], index: 0, kind: input, shape index: {}]
  %s1 = inlined_call_operand.hbm [shape: bf16[768,512], index: 1, kind: input, shape index: {}]
  %s2 = inlined_call_operand.hbm [shape: f32[1,512], index: 2, kind: input, shape index: {}]
  %s3 = inlined_call_operand.hbm [shape: f32[128,512], index: 3, kind: input, shape index: {}]
  %s4 = inlined_call_operand.hbm [shape: f32[64,128], index: 4, kind: output, shape index: {}]
  %s5 = sld [smem:[#allocation0]]
  $region69: #{tpu_custom_call.1} parent=0
    _
  %s7 = ssub.s32 1, %s5
  %s8 = scalar_select 0, %s7, %s5
  $region1: #{tpu_custom_call.1} parent=0
    #allocation5 [shape = 'u8[98304]{0}', space=vmem, size = 0x18000, scoped, tag = 'input window, operand 0']
    #allocation6 [shape = 's32[2]{0}', space=sflag, size = 0x8, scoped, tag = 'scoped memory for tpu_custom_call.1']
    #allocation7 [shape = 's32[2]{0}', space=sflag, size = 0x8, scoped, tag = 'scoped memory for tpu_custom_call.1']
    #allocation8 [shape = 'u8[786432]{0}', space=vmem, size = 0xc0000, scoped, tag = 'input window, operand 1, single buffered']
    #allocation9 [shape = 's32[1]{0}', space=sflag, size = 0x4, scoped, tag = 'scoped memory for tpu_custom_call.1']
    #allocation10 [shape = 'u8[2048]{0}', space=vmem, size = 0x800, scoped, tag = 'input window, operand 2, single buffered']
    #allocation11 [shape = 'u8[262144]{0}', space=vmem, size = 0x40000, scoped, tag = 'input window, operand 3, single buffered']
    #allocation12 [shape = 's32[1]{0}', space=sflag, size = 0x4, scoped, tag = 'scoped memory for tpu_custom_call.1']
    #allocation13 [shape = 'u8[32768]{0}', space=vmem, size = 0x8000, scoped, tag = 'output window, operand 0']
    %9 = vsyncpa [#allocation6], 0
    %s10 = scalar_lea.sflag [#allocation6], 1
    %11 = vsyncpa %s10, 0
    %12 = vsyncpa [#allocation9], 0
    %13 = vsyncpa [#allocation12], 0
    %14 = vsyncpa [#allocation7], 0
    %s15 = scalar_lea.sflag [#allocation7], 1
    %16 = vsyncpa %s15, 0
    loop: start=0, step=1, limit=4
    $region2: #{tpu_custom_call.1} parent=1 // loop_pre_header
      _
    $region3: #{tpu_custom_call.1} parent=1 // loop_header
      %s18 = sphi 0, %s22
      %p19 = scmp.ge.s32.totalorder %s18, 4
      %s28 = sphi 0, %s30
      %s31 = sphi 0, %s28
      %s32 = sphi 0, %s31
      %s48 = sphi 0, %s32
      %s52 = sphi 0, %s52
      %s54 = sphi 0, %s52
      %s55 = sphi 0, %s54
      %s69 = sphi 0, %s55
      %s73 = sphi 0, %s73
      %s75 = sphi 0, %s73
      %s76 = sphi 0, %s75
      %s90 = sphi 0, %s76
      %s94 = sphi 0, %s94
      %s96 = sphi 0, %s94
      %s97 = sphi 0, %s96
      %s111 = sphi 0, %s97
      %s117 = sphi 0, %s119
      %s120 = sphi 0, %s117
      %s121 = sphi 0, %s120
      %s137 = sphi 0, %s121
    $region4: #{tpu_custom_call.1} parent=1 // loop_header_branch
      %21 = sbr.rel (%p19) target = $region8
    $region5: #{tpu_custom_call.1} parent=1 // loop_body
      %s23 = ssub.s32 %s18, 1
      %s24 = ssub.s32 %s18, 2
      %s25 = sadd.s32 %s18, 1
      %s26 = ssub.s32 %s18, %s25
      %p27 = scmp.eq.s32.totalorder %s26, 0
      %s29 = sadd.s32 %s28, 1
      %s30 = scalar_select %p27, %s28, %s29
      %p33 = pneg %p27
      %p34 = scmp.eq.s32.totalorder %s18, 1
      %p35 = por %p33, %p34
      %p36 = scmp.ne.s32.totalorder %s28, %s31
      %p37 = scmp.eq.s32.totalorder %s18, 0
      %p38 = por %p36, %p37
      %p39 = scmp.ne.s32.totalorder %s28, %s31
      %p40 = scmp.eq.s32.totalorder %s23, 1
      %p41 = por %p39, %p40
      %p42 = scmp.ne.s32.totalorder %s31, %s32
      %p43 = scmp.eq.s32.totalorder %s23, 0
      %p44 = por %p42, %p43
      %p45 = scmp.ne.s32.totalorder %s31, %s32
      %p46 = scmp.eq.s32.totalorder %s24, 1
      %p47 = por %p45, %p46
      %p49 = scmp.ne.s32.totalorder %s32, %s48
      %p50 = scmp.eq.s32.totalorder %s24, 0
      %p51 = por %p49, %p50
      %s53 = sadd.s32 %s52, 1
      %p56 = scmp.eq.s32.totalorder %s18, 1
      %p57 = scmp.ne.s32.totalorder %s52, %s54
      %p58 = scmp.eq.s32.totalorder %s18, 0
      %p59 = por %p57, %p58
      %p60 = scmp.ne.s32.totalorder %s52, %s54
      %p61 = scmp.eq.s32.totalorder %s23, 1
      %p62 = por %p60, %p61
      %p63 = scmp.ne.s32.totalorder %s54, %s55
      %p64 = scmp.eq.s32.totalorder %s23, 0
      %p65 = por %p63, %p64
      %p66 = scmp.ne.s32.totalorder %s54, %s55
      %p67 = scmp.eq.s32.totalorder %s24, 1
      %p68 = por %p66, %p67
      %p70 = scmp.ne.s32.totalorder %s55, %s69
      %p71 = scmp.eq.s32.totalorder %s24, 0
      %p72 = por %p70, %p71
      %s74 = sadd.s32 %s73, 1
      %p77 = scmp.eq.s32.totalorder %s18, 1
      %p78 = scmp.ne.s32.totalorder %s73, %s75
      %p79 = scmp.eq.s32.totalorder %s18, 0
      %p80 = por %p78, %p79
      %p81 = scmp.ne.s32.totalorder %s73, %s75
      %p82 = scmp.eq.s32.totalorder %s23, 1
      %p83 = por %p81, %p82
      %p84 = scmp.ne.s32.totalorder %s75, %s76
      %p85 = scmp.eq.s32.totalorder %s23, 0
      %p86 = por %p84, %p85
      %p87 = scmp.ne.s32.totalorder %s75, %s76
      %p88 = scmp.eq.s32.totalorder %s24, 1
      %p89 = por %p87, %p88
      %p91 = scmp.ne.s32.totalorder %s76, %s90
      %p92 = scmp.eq.s32.totalorder %s24, 0
      %p93 = por %p91, %p92
      %s95 = sadd.s32 %s94, 1
      %p98 = scmp.eq.s32.totalorder %s18, 1
      %p99 = scmp.ne.s32.totalorder %s94, %s96
      %p100 = scmp.eq.s32.totalorder %s18, 0
      %p101 = por %p99, %p100
      %p102 = scmp.ne.s32.totalorder %s94, %s96
      %p103 = scmp.eq.s32.totalorder %s23, 1
      %p104 = por %p102, %p103
      %p105 = scmp.ne.s32.totalorder %s96, %s97
      %p106 = scmp.eq.s32.totalorder %s23, 0
      %p107 = por %p105, %p106
      %p108 = scmp.ne.s32.totalorder %s96, %s97
      %p109 = scmp.eq.s32.totalorder %s24, 1
      %p110 = por %p108, %p109
      %p112 = scmp.ne.s32.totalorder %s97, %s111
      %p113 = scmp.eq.s32.totalorder %s24, 0
      %p114 = por %p112, %p113
      %s115 = ssub.s32 %s18, %s25
      %p116 = scmp.eq.s32.totalorder %s115, 0
      %s118 = sadd.s32 %s117, 1
      %s119 = scalar_select %p116, %s117, %s118
      %p122 = pneg %p116
      %p123 = scmp.eq.s32.totalorder %s18, 1
      %p124 = por %p122, %p123
      %p125 = scmp.ne.s32.totalorder %s117, %s120
      %p126 = scmp.eq.s32.totalorder %s18, 0
      %p127 = por %p125, %p126
      %p128 = scmp.ne.s32.totalorder %s117, %s120
      %p129 = scmp.eq.s32.totalorder %s23, 1
      %p130 = por %p128, %p129
      %p131 = scmp.ne.s32.totalorder %s120, %s121
      %p132 = scmp.eq.s32.totalorder %s23, 0
      %p133 = por %p131, %p132
      %p134 = scmp.ne.s32.totalorder %s120, %s121
      %p135 = scmp.eq.s32.totalorder %s24, 1
      %p136 = por %p134, %p135
      %p138 = scmp.ne.s32.totalorder %s121, %s137
      %p139 = scmp.eq.s32.totalorder %s24, 0
      %p140 = por %p138, %p139
      %p141 = scmp.le.s32.totalorder 1, %s18
      %p142 = scmp.lt.s32.totalorder %s18, 3
      %p143 = pnand %p141, %p142
      %p144 = pneg %p143
      // Predicated region
      $region9: #{tpu_custom_call.1} parent=5 // pred_check
        _
      $region10: #{tpu_custom_call.1} parent=5 // pred_check_branch
        %146 = sbr.rel (%p143) target = $region12
      $region11: #{tpu_custom_call.1} parent=5 // pred_region
        %s147 = ssub.s32 %s18, 1
        // Predicated region
        $region13: #{tpu_custom_call.1} parent=11 // pred_check
          %p148 = pneg %p65
        $region14: #{tpu_custom_call.1} parent=11 // pred_check_branch
          %150 = sbr.rel (%p148) target = $region16
        $region15: #{tpu_custom_call.1} parent=11 // pred_region
          %s152 = ssub.s32 24576, 24576
          %153 = vsyncadd [#allocation9], %s152
          %s154 = sshll.u32 [#allocation8], 4
          %s155 = int_to_ptr.vmem [resolvable:$true] %s154
          %160 = dma.hbm_to_vmem [thread:$0]  %s1, 24576, %s155, [#allocation9], 256, 256, 16
        $region16: #{tpu_custom_call.1} parent=11 // pred_fallthru
          _
        // Predicated region
        $region17: #{tpu_custom_call.1} parent=11 // pred_check
          %p161 = pneg %p86
        $region18: #{tpu_custom_call.1} parent=11 // pred_check_branch
          %163 = sbr.rel (%p161) target = $region20
        $region19: #{tpu_custom_call.1} parent=11 // pred_region
          %s165 = ssub.s32 64, 64
          %166 = vsyncadd [#allocation9], %s165
          %s168 = sshll.u32 [#allocation10], 4
          %s169 = int_to_ptr.vmem [resolvable:$true] %s168
          %171 = dma.hbm_to_vmem [thread:$0]  %s2, 64, %s169, [#allocation9]
        $region20: #{tpu_custom_call.1} parent=11 // pred_fallthru
          _
        // Predicated region
        $region21: #{tpu_custom_call.1} parent=11 // pred_check
          %p172 = pneg %p107
        $region22: #{tpu_custom_call.1} parent=11 // pred_check_branch
          %174 = sbr.rel (%p172) target = $region24
        $region23: #{tpu_custom_call.1} parent=11 // pred_region
          %s176 = ssub.s32 8192, 8192
          %177 = vsyncadd [#allocation12], %s176
          %s178 = sshll.u32 [#allocation11], 4
          %s179 = int_to_ptr.vmem [resolvable:$true] %s178
          %184 = dma.hbm_to_vmem [thread:$0]  %s3, 8192, %s179, [#allocation12], 512, 512, 32
        $region24: #{tpu_custom_call.1} parent=11 // pred_fallthru
          _
      $region12: #{tpu_custom_call.1} parent=5 // pred_fallthru
        _
      %p185 = scmp.lt.s32.totalorder %s18, 2
      // Predicated region
      $region25: #{tpu_custom_call.1} parent=5 // pred_check
        %p186 = pneg %p185
      $region26: #{tpu_custom_call.1} parent=5 // pred_check_branch
        %188 = sbr.rel (%p186) target = $region28
      $region27: #{tpu_custom_call.1} parent=5 // pred_region
        // Predicated region
        $region29: #{tpu_custom_call.1} parent=27 // pred_check
          %p189 = pneg %p38
        $region30: #{tpu_custom_call.1} parent=27 // pred_check_branch
          %191 = sbr.rel (%p189) target = $region32
        $region31: #{tpu_custom_call.1} parent=27 // pred_region
          %s192 = sand.u32 %s28, 1
          %s193 = scalar_lea.sflag [#allocation6], %s192
          %s194 = sand.u32 %s28, 1
          %s195 = smul.addr %s194, 96
          %s196 = scalar_lea.vmem [#allocation5], %s195
          %s197 = smul.u32 4, %s18
          %s199 = ssub.s32 1536, 1536
          %200 = vsyncadd %s193, %s199
          %s201 = smul.addr %s197, 6
          %s202 = smul.addr %s201, 64
          %s203 = scalar_lea.hbm %s0, %s202
          %s204 = sshll.u32 %s196, 4
          %s205 = int_to_ptr.vmem [resolvable:$true] %s204
          %210 = dma.hbm_to_vmem [thread:$0]  %s203, 1536, %s205, %s193, 384, 384, 24
        $region32: #{tpu_custom_call.1} parent=27 // pred_fallthru
          _
      $region28: #{tpu_custom_call.1} parent=5 // pred_fallthru
        _
      %p211 = scmp.le.s32.totalorder 1, %s18
      %p212 = scmp.lt.s32.totalorder %s18, 3
      %p213 = pnand %p211, %p212
      %p214 = pneg %p213
      // Predicated region
      $region33: #{tpu_custom_call.1} parent=5 // pred_check
        _
      $region34: #{tpu_custom_call.1} parent=5 // pred_check_branch
        %216 = sbr.rel (%p213) target = $region36
      $region35: #{tpu_custom_call.1} parent=5 // pred_region
        %s217 = ssub.s32 %s18, 1
        %s218 = sand.u32 %s31, 1
        %s219 = scalar_lea.sflag [#allocation6], %s218
        %s220 = sand.u32 %s31, 1
        %s221 = smul.addr %s220, 96
        %s222 = scalar_lea.vmem [#allocation5], %s221
        // Predicated region
        $region37: #{tpu_custom_call.1} parent=35 // pred_check
          %p223 = pneg %p44
        $region38: #{tpu_custom_call.1} parent=35 // pred_check_branch
          %225 = sbr.rel (%p223) target = $region40
        $region39: #{tpu_custom_call.1} parent=35 // pred_region
          %226 = dma.done %s219, 1536
        $region40: #{tpu_custom_call.1} parent=35 // pred_fallthru
          _
        // Predicated region
        $region41: #{tpu_custom_call.1} parent=35 // pred_check
          %p227 = pneg %p65
        $region42: #{tpu_custom_call.1} parent=35 // pred_check_branch
          %229 = sbr.rel (%p227) target = $region44
        $region43: #{tpu_custom_call.1} parent=35 // pred_region
          %230 = dma.done [#allocation9], 24576
        $region44: #{tpu_custom_call.1} parent=35 // pred_fallthru
          _
        // Predicated region
        $region45: #{tpu_custom_call.1} parent=35 // pred_check
          %p231 = pneg %p86
        $region46: #{tpu_custom_call.1} parent=35 // pred_check_branch
          %233 = sbr.rel (%p231) target = $region48
        $region47: #{tpu_custom_call.1} parent=35 // pred_region
          %234 = dma.done [#allocation9], 64
        $region48: #{tpu_custom_call.1} parent=35 // pred_fallthru
          _
        // Predicated region
        $region49: #{tpu_custom_call.1} parent=35 // pred_check
          %p235 = pneg %p107
        $region50: #{tpu_custom_call.1} parent=35 // pred_check_branch
          %237 = sbr.rel (%p235) target = $region52
        $region51: #{tpu_custom_call.1} parent=35 // pred_region
          %238 = dma.done [#allocation12], 8192
        $region52: #{tpu_custom_call.1} parent=35 // pred_fallthru
          _
        %s239 = sand.u32 %s31, 1
        %s240 = scalar_lea.sflag [#allocation6], %s239
        %s241 = sand.u32 %s31, 1
        %s242 = smul.addr %s241, 96
        %s243 = scalar_lea.vmem [#allocation5], %s242
        %p244 = pneg %p44
        %p245 = pneg %p41
        %p246 = pneg %p65
        %p247 = pneg %p62
        %p248 = pneg %p86
        %p249 = pneg %p83
        %p250 = pneg %p107
        %p251 = pneg %p104
        %p252 = pneg %p133
        %p253 = pneg %p130
        %s254 = sand.u32 %s120, 1
        %s255 = scalar_lea.sflag [#allocation7], %s254
        %s256 = sand.u32 %s120, 1
        %s257 = smul.addr %s256, 32
        %s258 = scalar_lea.vmem [#allocation13], %s257
        %s259 = smul.u32 4, %s23
        %s260 = smul.u32 4, %s23
        %p261 = scmp.eq.s32.totalorder %s23, 0
        // Predicated region
        $region53: #{tpu_custom_call.1} parent=35 // pred_check
          %p262 = pneg %p261
        $region54: #{tpu_custom_call.1} parent=35 // pred_check_branch
          %264 = sbr.rel (%p262) target = $region56
        $region55: #{tpu_custom_call.1} parent=35 // pred_region
          %265 = vst [vmem:[#allocation3] sm:$0xff] 0.0
          %266 = vst [vmem:[#allocation4] sm:$0xff] 0.0
        $region56: #{tpu_custom_call.1} parent=35 // pred_fallthru
          _
        %v267 = vld [vmem:[%s222] sm:$0xff]
        %v268 = vld [vmem:[%s222 + $0x8] sm:$0xff]
        %v269 = vld [vmem:[%s222 + $0x10] sm:$0xff]
        %v270 = vld [vmem:[%s222 + $0x18] sm:$0xff]
        %v271 = vld [vmem:[%s222 + $0x20] sm:$0xff]
        %v272 = vld [vmem:[%s222 + $0x28] sm:$0xff]
        %v273 = vld [vmem:[%s222 + $0x30] sm:$0xff]
        %v274 = vld [vmem:[%s222 + $0x38] sm:$0xff]
        %v275 = vld [vmem:[%s222 + $0x40] sm:$0xff]
        %v276 = vld [vmem:[%s222 + $0x48] sm:$0xff]
        %v277 = vld [vmem:[%s222 + $0x50] sm:$0xff]
        %v278 = vld [vmem:[%s222 + $0x58] sm:$0xff]
        %v279 = vld [vmem:[#allocation8] sm:$0xff]
        %v280 = vld [vmem:[#allocation8 + $0x8] sm:$0xff]
        %v281 = vld [vmem:[#allocation8 + $0x10] sm:$0xff]
        %v282 = vld [vmem:[#allocation8 + $0x18] sm:$0xff]
        %v283 = vld [vmem:[#allocation8 + $0x20] sm:$0xff]
        %v284 = vld [vmem:[#allocation8 + $0x28] sm:$0xff]
        %v285 = vld [vmem:[#allocation8 + $0x30] sm:$0xff]
        %v286 = vld [vmem:[#allocation8 + $0x38] sm:$0xff]
        %v287 = vld [vmem:[#allocation8 + $0x40] sm:$0xff]
        %v288 = vld [vmem:[#allocation8 + $0x48] sm:$0xff]
        %v289 = vld [vmem:[#allocation8 + $0x50] sm:$0xff]
        %v290 = vld [vmem:[#allocation8 + $0x58] sm:$0xff]
        %v291 = vld [vmem:[#allocation8 + $0x60] sm:$0xff]
        %v292 = vld [vmem:[#allocation8 + $0x68] sm:$0xff]
        %v293 = vld [vmem:[#allocation8 + $0x70] sm:$0xff]
        %v294 = vld [vmem:[#allocation8 + $0x78] sm:$0xff]
        %v295 = vld [vmem:[#allocation8 + $0x80] sm:$0xff]
        %v296 = vld [vmem:[#allocation8 + $0x88] sm:$0xff]
        %v297 = vld [vmem:[#allocation8 + $0x90] sm:$0xff]
        %v298 = vld [vmem:[#allocation8 + $0x98] sm:$0xff]
        %v299 = vld [vmem:[#allocation8 + $0xa0] sm:$0xff]
        %v300 = vld [vmem:[#allocation8 + $0xa8] sm:$0xff]
        %v301 = vld [vmem:[#allocation8 + $0xb0] sm:$0xff]
        %v302 = vld [vmem:[#allocation8 + $0xb8] sm:$0xff]
        %v303 = vld [vmem:[#allocation8 + $0xc0] sm:$0xff]
        %v304 = vld [vmem:[#allocation8 + $0xc8] sm:$0xff]
        %v305 = vld [vmem:[#allocation8 + $0xd0] sm:$0xff]
        %v306 = vld [vmem:[#allocation8 + $0xd8] sm:$0xff]
        %v307 = vld [vmem:[#allocation8 + $0xe0] sm:$0xff]
        %v308 = vld [vmem:[#allocation8 + $0xe8] sm:$0xff]
        %v309 = vld [vmem:[#allocation8 + $0xf0] sm:$0xff]
        %v310 = vld [vmem:[#allocation8 + $0xf8] sm:$0xff]
        %v311 = vld [vmem:[#allocation8 + $0x100] sm:$0xff]
        %v312 = vld [vmem:[#allocation8 + $0x108] sm:$0xff]
        %v313 = vld [vmem:[#allocation8 + $0x110] sm:$0xff]
        %v314 = vld [vmem:[#allocation8 + $0x118] sm:$0xff]
        %v315 = vld [vmem:[#allocation8 + $0x120] sm:$0xff]
        %v316 = vld [vmem:[#allocation8 + $0x128] sm:$0xff]
        %v317 = vld [vmem:[#allocation8 + $0x130] sm:$0xff]
        %v318 = vld [vmem:[#allocation8 + $0x138] sm:$0xff]
        %v319 = vld [vmem:[#allocation8 + $0x140] sm:$0xff]
        %v320 = vld [vmem:[#allocation8 + $0x148] sm:$0xff]
        %v321 = vld [vmem:[#allocation8 + $0x150] sm:$0xff]
        %v322 = vld [vmem:[#allocation8 + $0x158] sm:$0xff]
        %v323 = vld [vmem:[#allocation8 + $0x160] sm:$0xff]
        %v324 = vld [vmem:[#allocation8 + $0x168] sm:$0xff]
        %v325 = vld [vmem:[#allocation8 + $0x170] sm:$0xff]
        %v326 = vld [vmem:[#allocation8 + $0x178] sm:$0xff]
        %v327 = vld [vmem:[#allocation8 + $0x180] sm:$0xff]
        %v328 = vld [vmem:[#allocation8 + $0x188] sm:$0xff]
        %v329 = vld [vmem:[#allocation8 + $0x190] sm:$0xff]
        %v330 = vld [vmem:[#allocation8 + $0x198] sm:$0xff]
        %v331 = vld [vmem:[#allocation8 + $0x1a0] sm:$0xff]
        %v332 = vld [vmem:[#allocation8 + $0x1a8] sm:$0xff]
        %v333 = vld [vmem:[#allocation8 + $0x1b0] sm:$0xff]
        %v334 = vld [vmem:[#allocation8 + $0x1b8] sm:$0xff]
        %v335 = vld [vmem:[#allocation8 + $0x1c0] sm:$0xff]
        %v336 = vld [vmem:[#allocation8 + $0x1c8] sm:$0xff]
        %v337 = vld [vmem:[#allocation8 + $0x1d0] sm:$0xff]
        %v338 = vld [vmem:[#allocation8 + $0x1d8] sm:$0xff]
        %v339 = vld [vmem:[#allocation8 + $0x1e0] sm:$0xff]
        %v340 = vld [vmem:[#allocation8 + $0x1e8] sm:$0xff]
        %v341 = vld [vmem:[#allocation8 + $0x1f0] sm:$0xff]
        %v342 = vld [vmem:[#allocation8 + $0x1f8] sm:$0xff]
        %v343 = vld [vmem:[#allocation8 + $0x200] sm:$0xff]
        %v344 = vld [vmem:[#allocation8 + $0x208] sm:$0xff]
        %v345 = vld [vmem:[#allocation8 + $0x210] sm:$0xff]
        %v346 = vld [vmem:[#allocation8 + $0x218] sm:$0xff]
        %v347 = vld [vmem:[#allocation8 + $0x220] sm:$0xff]
        %v348 = vld [vmem:[#allocation8 + $0x228] sm:$0xff]
        %v349 = vld [vmem:[#allocation8 + $0x230] sm:$0xff]
        %v350 = vld [vmem:[#allocation8 + $0x238] sm:$0xff]
        %v351 = vld [vmem:[#allocation8 + $0x240] sm:$0xff]
        %v352 = vld [vmem:[#allocation8 + $0x248] sm:$0xff]
        %v353 = vld [vmem:[#allocation8 + $0x250] sm:$0xff]
        %v354 = vld [vmem:[#allocation8 + $0x258] sm:$0xff]
        %v355 = vld [vmem:[#allocation8 + $0x260] sm:$0xff]
        %v356 = vld [vmem:[#allocation8 + $0x268] sm:$0xff]
        %v357 = vld [vmem:[#allocation8 + $0x270] sm:$0xff]
        %v358 = vld [vmem:[#allocation8 + $0x278] sm:$0xff]
        %v359 = vld [vmem:[#allocation8 + $0x280] sm:$0xff]
        %v360 = vld [vmem:[#allocation8 + $0x288] sm:$0xff]
        %v361 = vld [vmem:[#allocation8 + $0x290] sm:$0xff]
        %v362 = vld [vmem:[#allocation8 + $0x298] sm:$0xff]
        %v363 = vld [vmem:[#allocation8 + $0x2a0] sm:$0xff]
        %v364 = vld [vmem:[#allocation8 + $0x2a8] sm:$0xff]
        %v365 = vld [vmem:[#allocation8 + $0x2b0] sm:$0xff]
        %v366 = vld [vmem:[#allocation8 + $0x2b8] sm:$0xff]
        %v367 = vld [vmem:[#allocation8 + $0x2c0] sm:$0xff]
        %v368 = vld [vmem:[#allocation8 + $0x2c8] sm:$0xff]
        %v369 = vld [vmem:[#allocation8 + $0x2d0] sm:$0xff]
        %v370 = vld [vmem:[#allocation8 + $0x2d8] sm:$0xff]
        %v371 = vld [vmem:[#allocation8 + $0x2e0] sm:$0xff]
        %v372 = vld [vmem:[#allocation8 + $0x2e8] sm:$0xff]
        %v373 = vld [vmem:[#allocation8 + $0x2f0] sm:$0xff]
        %v374 = vld [vmem:[#allocation8 + $0x2f8] sm:$0xff]
        %v375 = vld [vmem:[#allocation8 + $0x300] sm:$0xff]
        %v376 = vld [vmem:[#allocation8 + $0x308] sm:$0xff]
        %v377 = vld [vmem:[#allocation8 + $0x310] sm:$0xff]
        %v378 = vld [vmem:[#allocation8 + $0x318] sm:$0xff]
        %v379 = vld [vmem:[#allocation8 + $0x320] sm:$0xff]
        %v380 = vld [vmem:[#allocation8 + $0x328] sm:$0xff]
        %v381 = vld [vmem:[#allocation8 + $0x330] sm:$0xff]
        %v382 = vld [vmem:[#allocation8 + $0x338] sm:$0xff]
        %v383 = vld [vmem:[#allocation8 + $0x340] sm:$0xff]
        %v384 = vld [vmem:[#allocation8 + $0x348] sm:$0xff]
        %v385 = vld [vmem:[#allocation8 + $0x350] sm:$0xff]
        %v386 = vld [vmem:[#allocation8 + $0x358] sm:$0xff]
        %v387 = vld [vmem:[#allocation8 + $0x360] sm:$0xff]
        %v388 = vld [vmem:[#allocation8 + $0x368] sm:$0xff]
        %v389 = vld [vmem:[#allocation8 + $0x370] sm:$0xff]
        %v390 = vld [vmem:[#allocation8 + $0x378] sm:$0xff]
        %v391 = vld [vmem:[#allocation8 + $0x380] sm:$0xff]
        %v392 = vld [vmem:[#allocation8 + $0x388] sm:$0xff]
        %v393 = vld [vmem:[#allocation8 + $0x390] sm:$0xff]
        %v394 = vld [vmem:[#allocation8 + $0x398] sm:$0xff]
        %v395 = vld [vmem:[#allocation8 + $0x3a0] sm:$0xff]
        %v396 = vld [vmem:[#allocation8 + $0x3a8] sm:$0xff]
        %v397 = vld [vmem:[#allocation8 + $0x3b0] sm:$0xff]
        %v398 = vld [vmem:[#allocation8 + $0x3b8] sm:$0xff]
        %v399 = vld [vmem:[#allocation8 + $0x3c0] sm:$0xff]
        %v400 = vld [vmem:[#allocation8 + $0x3c8] sm:$0xff]
        %v401 = vld [vmem:[#allocation8 + $0x3d0] sm:$0xff]
        %v402 = vld [vmem:[#allocation8 + $0x3d8] sm:$0xff]
        %v403 = vld [vmem:[#allocation8 + $0x3e0] sm:$0xff]
        %v404 = vld [vmem:[#allocation8 + $0x3e8] sm:$0xff]
        %v405 = vld [vmem:[#allocation8 + $0x3f0] sm:$0xff]
        %v406 = vld [vmem:[#allocation8 + $0x3f8] sm:$0xff]
        %v407 = vld [vmem:[#allocation8 + $0x400] sm:$0xff]
        %v408 = vld [vmem:[#allocation8 + $0x408] sm:$0xff]
        %v409 = vld [vmem:[#allocation8 + $0x410] sm:$0xff]
        %v410 = vld [vmem:[#allocation8 + $0x418] sm:$0xff]
        %v411 = vld [vmem:[#allocation8 + $0x420] sm:$0xff]
        %v412 = vld [vmem:[#allocation8 + $0x428] sm:$0xff]
        %v413 = vld [vmem:[#allocation8 + $0x430] sm:$0xff]
        %v414 = vld [vmem:[#allocation8 + $0x438] sm:$0xff]
        %v415 = vld [vmem:[#allocation8 + $0x440] sm:$0xff]
        %v416 = vld [vmem:[#allocation8 + $0x448] sm:$0xff]
        %v417 = vld [vmem:[#allocation8 + $0x450] sm:$0xff]
        %v418 = vld [vmem:[#allocation8 + $0x458] sm:$0xff]
        %v419 = vld [vmem:[#allocation8 + $0x460] sm:$0xff]
        %v420 = vld [vmem:[#allocation8 + $0x468] sm:$0xff]
        %v421 = vld [vmem:[#allocation8 + $0x470] sm:$0xff]
        %v422 = vld [vmem:[#allocation8 + $0x478] sm:$0xff]
        %v423 = vld [vmem:[#allocation8 + $0x480] sm:$0xff]
        %v424 = vld [vmem:[#allocation8 + $0x488] sm:$0xff]
        %v425 = vld [vmem:[#allocation8 + $0x490] sm:$0xff]
        %v426 = vld [vmem:[#allocation8 + $0x498] sm:$0xff]
        %v427 = vld [vmem:[#allocation8 + $0x4a0] sm:$0xff]
        %v428 = vld [vmem:[#allocation8 + $0x4a8] sm:$0xff]
        %v429 = vld [vmem:[#allocation8 + $0x4b0] sm:$0xff]
        %v430 = vld [vmem:[#allocation8 + $0x4b8] sm:$0xff]
        %v431 = vld [vmem:[#allocation8 + $0x4c0] sm:$0xff]
        %v432 = vld [vmem:[#allocation8 + $0x4c8] sm:$0xff]
        %v433 = vld [vmem:[#allocation8 + $0x4d0] sm:$0xff]
        %v434 = vld [vmem:[#allocation8 + $0x4d8] sm:$0xff]
        %v435 = vld [vmem:[#allocation8 + $0x4e0] sm:$0xff]
        %v436 = vld [vmem:[#allocation8 + $0x4e8] sm:$0xff]
        %v437 = vld [vmem:[#allocation8 + $0x4f0] sm:$0xff]
        %v438 = vld [vmem:[#allocation8 + $0x4f8] sm:$0xff]
        %v439 = vld [vmem:[#allocation8 + $0x500] sm:$0xff]
        %v440 = vld [vmem:[#allocation8 + $0x508] sm:$0xff]
        %v441 = vld [vmem:[#allocation8 + $0x510] sm:$0xff]
        %v442 = vld [vmem:[#allocation8 + $0x518] sm:$0xff]
        %v443 = vld [vmem:[#allocation8 + $0x520] sm:$0xff]
        %v444 = vld [vmem:[#allocation8 + $0x528] sm:$0xff]
        %v445 = vld [vmem:[#allocation8 + $0x530] sm:$0xff]
        %v446 = vld [vmem:[#allocation8 + $0x538] sm:$0xff]
        %v447 = vld [vmem:[#allocation8 + $0x540] sm:$0xff]
        %v448 = vld [vmem:[#allocation8 + $0x548] sm:$0xff]
        %v449 = vld [vmem:[#allocation8 + $0x550] sm:$0xff]
        %v450 = vld [vmem:[#allocation8 + $0x558] sm:$0xff]
        %v451 = vld [vmem:[#allocation8 + $0x560] sm:$0xff]
        %v452 = vld [vmem:[#allocation8 + $0x568] sm:$0xff]
        %v453 = vld [vmem:[#allocation8 + $0x570] sm:$0xff]
        %v454 = vld [vmem:[#allocation8 + $0x578] sm:$0xff]
        %v455 = vld [vmem:[#allocation8 + $0x580] sm:$0xff]
        %v456 = vld [vmem:[#allocation8 + $0x588] sm:$0xff]
        %v457 = vld [vmem:[#allocation8 + $0x590] sm:$0xff]
        %v458 = vld [vmem:[#allocation8 + $0x598] sm:$0xff]
        %v459 = vld [vmem:[#allocation8 + $0x5a0] sm:$0xff]
        %v460 = vld [vmem:[#allocation8 + $0x5a8] sm:$0xff]
        %v461 = vld [vmem:[#allocation8 + $0x5b0] sm:$0xff]
        %v462 = vld [vmem:[#allocation8 + $0x5b8] sm:$0xff]
        %v463 = vld [vmem:[#allocation8 + $0x5c0] sm:$0xff]
        %v464 = vld [vmem:[#allocation8 + $0x5c8] sm:$0xff]
        %v465 = vld [vmem:[#allocation8 + $0x5d0] sm:$0xff]
        %v466 = vld [vmem:[#allocation8 + $0x5d8] sm:$0xff]
        %v467 = vld [vmem:[#allocation8 + $0x5e0] sm:$0xff]
        %v468 = vld [vmem:[#allocation8 + $0x5e8] sm:$0xff]
        %v469 = vld [vmem:[#allocation8 + $0x5f0] sm:$0xff]
        %v470 = vld [vmem:[#allocation8 + $0x5f8] sm:$0xff]
        %v471 = vld [vmem:[#allocation10] sm:$0xf]
        %v473 = vlaneseq
        %v474 = vshrl.u32 %v473, 7
        %v475 = vsub.s32 0, %v474
        %v476 = vrot.slane %v471, %v475
        %v477 = vlaneseq
        %v478 = vshrl.u32 %v477, 7
        %v479 = vsub.s32 1, %v478
        %v480 = vrot.slane %v471, %v479
        %v481 = vlaneseq
        %v482 = vshrl.u32 %v481, 7
        %v483 = vsub.s32 2, %v482
        %v484 = vrot.slane %v471, %v483
        %v485 = vlaneseq
        %v486 = vshrl.u32 %v485, 7
        %v487 = vsub.s32 3, %v486
        %v488 = vrot.slane %v471, %v487
        %v505 = vunpack.c.l.b16 %v267
        %v506 = vunpack.c.h.b16 %v267
        %v507 = vunpack.c.l.b16 %v268
        %v508 = vunpack.c.h.b16 %v268
        %v509 = vunpack.c.l.b16 %v269
        %v510 = vunpack.c.h.b16 %v269
        %v511 = vunpack.c.l.b16 %v270
        %v512 = vunpack.c.h.b16 %v270
        %v513 = vunpack.c.l.b16 %v271
        %v514 = vunpack.c.h.b16 %v271
        %v515 = vunpack.c.l.b16 %v272
        %v516 = vunpack.c.h.b16 %v272
        %v517 = vunpack.c.l.b16 %v273
        %v518 = vunpack.c.h.b16 %v273
        %v519 = vunpack.c.l.b16 %v274
        %v520 = vunpack.c.h.b16 %v274
        %v521 = vunpack.c.l.b16 %v275
        %v522 = vunpack.c.h.b16 %v275
        %v523 = vunpack.c.l.b16 %v276
        %v524 = vunpack.c.h.b16 %v276
        %v525 = vunpack.c.l.b16 %v277
        %v526 = vunpack.c.h.b16 %v277
        %v527 = vunpack.c.l.b16 %v278
        %v528 = vunpack.c.h.b16 %v278
        %v529 = vpack.c.b16 %v511, %v505
        %v530 = vpack.c.b16 %v512, %v506
        %v531 = vpack.c.b16 %v513, %v507
        %v532 = vpack.c.b16 %v514, %v508
        %v533 = vpack.c.b16 %v515, %v509
        %v534 = vpack.c.b16 %v516, %v510
        %v535 = vpack.c.b16 %v523, %v517
        %v536 = vpack.c.b16 %v524, %v518
        %v537 = vpack.c.b16 %v525, %v519
        %v538 = vpack.c.b16 %v526, %v520
        %v539 = vpack.c.b16 %v527, %v521
        %v540 = vpack.c.b16 %v528, %v522
        %v745 = vunpack.c.l.b16 %v279
        %v746 = vunpack.c.h.b16 %v279
        %v747 = vunpack.c.l.b16 %v280
        %v748 = vunpack.c.h.b16 %v280
        %v749 = vunpack.c.l.b16 %v281
        %v750 = vunpack.c.h.b16 %v281
        %v751 = vunpack.c.l.b16 %v282
        %v752 = vunpack.c.h.b16 %v282
        %v753 = vunpack.c.l.b16 %v283
        %v754 = vunpack.c.h.b16 %v283
        %v755 = vunpack.c.l.b16 %v284
        %v756 = vunpack.c.h.b16 %v284
        %v757 = vunpack.c.l.b16 %v285
        %v758 = vunpack.c.h.b16 %v285
        %v759 = vunpack.c.l.b16 %v286
        %v760 = vunpack.c.h.b16 %v286
        %v761 = vunpack.c.l.b16 %v287
        %v762 = vunpack.c.h.b16 %v287
        %v763 = vunpack.c.l.b16 %v288
        %v764 = vunpack.c.h.b16 %v288
        %v765 = vunpack.c.l.b16 %v289
        %v766 = vunpack.c.h.b16 %v289
        %v767 = vunpack.c.l.b16 %v290
        %v768 = vunpack.c.h.b16 %v290
        %v769 = vunpack.c.l.b16 %v291
        %v770 = vunpack.c.h.b16 %v291
        %v771 = vunpack.c.l.b16 %v292
        %v772 = vunpack.c.h.b16 %v292
        %v773 = vunpack.c.l.b16 %v293
        %v774 = vunpack.c.h.b16 %v293
        %v775 = vunpack.c.l.b16 %v294
        %v776 = vunpack.c.h.b16 %v294
        %v777 = vunpack.c.l.b16 %v295
        %v778 = vunpack.c.h.b16 %v295
        %v779 = vunpack.c.l.b16 %v296
        %v780 = vunpack.c.h.b16 %v296
        %v781 = vunpack.c.l.b16 %v297
        %v782 = vunpack.c.h.b16 %v297
        %v783 = vunpack.c.l.b16 %v298
        %v784 = vunpack.c.h.b16 %v298
        %v785 = vunpack.c.l.b16 %v299
        %v786 = vunpack.c.h.b16 %v299
        %v787 = vunpack.c.l.b16 %v300
        %v788 = vunpack.c.h.b16 %v300
        %v789 = vunpack.c.l.b16 %v301
        %v790 = vunpack.c.h.b16 %v301
        %v791 = vunpack.c.l.b16 %v302
        %v792 = vunpack.c.h.b16 %v302
        %v793 = vunpack.c.l.b16 %v303
        %v794 = vunpack.c.h.b16 %v303
        %v795 = vunpack.c.l.b16 %v304
        %v796 = vunpack.c.h.b16 %v304
        %v797 = vunpack.c.l.b16 %v305
        %v798 = vunpack.c.h.b16 %v305
        %v799 = vunpack.c.l.b16 %v306
        %v800 = vunpack.c.h.b16 %v306
        %v801 = vunpack.c.l.b16 %v307
        %v802 = vunpack.c.h.b16 %v307
        %v803 = vunpack.c.l.b16 %v308
        %v804 = vunpack.c.h.b16 %v308
        %v805 = vunpack.c.l.b16 %v309
        %v806 = vunpack.c.h.b16 %v309
        %v807 = vunpack.c.l.b16 %v310
        %v808 = vunpack.c.h.b16 %v310
        %v809 = vunpack.c.l.b16 %v311
        %v810 = vunpack.c.h.b16 %v311
        %v811 = vunpack.c.l.b16 %v312
        %v812 = vunpack.c.h.b16 %v312
        %v813 = vunpack.c.l.b16 %v313
        %v814 = vunpack.c.h.b16 %v313
        %v815 = vunpack.c.l.b16 %v314
        %v816 = vunpack.c.h.b16 %v314
        %v817 = vunpack.c.l.b16 %v315
        %v818 = vunpack.c.h.b16 %v315
        %v819 = vunpack.c.l.b16 %v316
        %v820 = vunpack.c.h.b16 %v316
        %v821 = vunpack.c.l.b16 %v317
        %v822 = vunpack.c.h.b16 %v317
        %v823 = vunpack.c.l.b16 %v318
        %v824 = vunpack.c.h.b16 %v318
        %v825 = vunpack.c.l.b16 %v319
        %v826 = vunpack.c.h.b16 %v319
        %v827 = vunpack.c.l.b16 %v320
        %v828 = vunpack.c.h.b16 %v320
        %v829 = vunpack.c.l.b16 %v321
        %v830 = vunpack.c.h.b16 %v321
        %v831 = vunpack.c.l.b16 %v322
        %v832 = vunpack.c.h.b16 %v322
        %v833 = vunpack.c.l.b16 %v323
        %v834 = vunpack.c.h.b16 %v323
        %v835 = vunpack.c.l.b16 %v324
        %v836 = vunpack.c.h.b16 %v324
        %v837 = vunpack.c.l.b16 %v325
        %v838 = vunpack.c.h.b16 %v325
        %v839 = vunpack.c.l.b16 %v326
        %v840 = vunpack.c.h.b16 %v326
        %v841 = vunpack.c.l.b16 %v327
        %v842 = vunpack.c.h.b16 %v327
        %v843 = vunpack.c.l.b16 %v328
        %v844 = vunpack.c.h.b16 %v328
        %v845 = vunpack.c.l.b16 %v329
        %v846 = vunpack.c.h.b16 %v329
        %v847 = vunpack.c.l.b16 %v330
        %v848 = vunpack.c.h.b16 %v330
        %v849 = vunpack.c.l.b16 %v331
        %v850 = vunpack.c.h.b16 %v331
        %v851 = vunpack.c.l.b16 %v332
        %v852 = vunpack.c.h.b16 %v332
        %v853 = vunpack.c.l.b16 %v333
        %v854 = vunpack.c.h.b16 %v333
        %v855 = vunpack.c.l.b16 %v334
        %v856 = vunpack.c.h.b16 %v334
        %v857 = vunpack.c.l.b16 %v335
        %v858 = vunpack.c.h.b16 %v335
        %v859 = vunpack.c.l.b16 %v336
        %v860 = vunpack.c.h.b16 %v336
        %v861 = vunpack.c.l.b16 %v337
        %v862 = vunpack.c.h.b16 %v337
        %v863 = vunpack.c.l.b16 %v338
        %v864 = vunpack.c.h.b16 %v338
        %v865 = vunpack.c.l.b16 %v339
        %v866 = vunpack.c.h.b16 %v339
        %v867 = vunpack.c.l.b16 %v340
        %v868 = vunpack.c.h.b16 %v340
        %v869 = vunpack.c.l.b16 %v341
        %v870 = vunpack.c.h.b16 %v341
        %v871 = vunpack.c.l.b16 %v342
        %v872 = vunpack.c.h.b16 %v342
        %v873 = vunpack.c.l.b16 %v343
        %v874 = vunpack.c.h.b16 %v343
        %v875 = vunpack.c.l.b16 %v344
        %v876 = vunpack.c.h.b16 %v344
        %v877 = vunpack.c.l.b16 %v345
        %v878 = vunpack.c.h.b16 %v345
        %v879 = vunpack.c.l.b16 %v346
        %v880 = vunpack.c.h.b16 %v346
        %v881 = vunpack.c.l.b16 %v347
        %v882 = vunpack.c.h.b16 %v347
        %v883 = vunpack.c.l.b16 %v348
        %v884 = vunpack.c.h.b16 %v348
        %v885 = vunpack.c.l.b16 %v349
        %v886 = vunpack.c.h.b16 %v349
        %v887 = vunpack.c.l.b16 %v350
        %v888 = vunpack.c.h.b16 %v350
        %v889 = vunpack.c.l.b16 %v351
        %v890 = vunpack.c.h.b16 %v351
        %v891 = vunpack.c.l.b16 %v352
        %v892 = vunpack.c.h.b16 %v352
        %v893 = vunpack.c.l.b16 %v353
        %v894 = vunpack.c.h.b16 %v353
        %v895 = vunpack.c.l.b16 %v354
        %v896 = vunpack.c.h.b16 %v354
        %v897 = vunpack.c.l.b16 %v355
        %v898 = vunpack.c.h.b16 %v355
        %v899 = vunpack.c.l.b16 %v356
        %v900 = vunpack.c.h.b16 %v356
        %v901 = vunpack.c.l.b16 %v357
        %v902 = vunpack.c.h.b16 %v357
        %v903 = vunpack.c.l.b16 %v358
        %v904 = vunpack.c.h.b16 %v358
        %v905 = vunpack.c.l.b16 %v359
        %v906 = vunpack.c.h.b16 %v359
        %v907 = vunpack.c.l.b16 %v360
        %v908 = vunpack.c.h.b16 %v360
        %v909 = vunpack.c.l.b16 %v361
        %v910 = vunpack.c.h.b16 %v361
        %v911 = vunpack.c.l.b16 %v362
        %v912 = vunpack.c.h.b16 %v362
        %v913 = vunpack.c.l.b16 %v363
        %v914 = vunpack.c.h.b16 %v363
        %v915 = vunpack.c.l.b16 %v364
        %v916 = vunpack.c.h.b16 %v364
        %v917 = vunpack.c.l.b16 %v365
        %v918 = vunpack.c.h.b16 %v365
        %v919 = vunpack.c.l.b16 %v366
        %v920 = vunpack.c.h.b16 %v366
        %v921 = vunpack.c.l.b16 %v367
        %v922 = vunpack.c.h.b16 %v367
        %v923 = vunpack.c.l.b16 %v368
        %v924 = vunpack.c.h.b16 %v368
        %v925 = vunpack.c.l.b16 %v369
        %v926 = vunpack.c.h.b16 %v369
        %v927 = vunpack.c.l.b16 %v370
        %v928 = vunpack.c.h.b16 %v370
        %v929 = vunpack.c.l.b16 %v371
        %v930 = vunpack.c.h.b16 %v371
        %v931 = vunpack.c.l.b16 %v372
        %v932 = vunpack.c.h.b16 %v372
        %v933 = vunpack.c.l.b16 %v373
        %v934 = vunpack.c.h.b16 %v373
        %v935 = vunpack.c.l.b16 %v374
        %v936 = vunpack.c.h.b16 %v374
        %v937 = vunpack.c.l.b16 %v375
        %v938 = vunpack.c.h.b16 %v375
        %v939 = vunpack.c.l.b16 %v376
        %v940 = vunpack.c.h.b16 %v376
        %v941 = vunpack.c.l.b16 %v377
        %v942 = vunpack.c.h.b16 %v377
        %v943 = vunpack.c.l.b16 %v378
        %v944 = vunpack.c.h.b16 %v378
        %v945 = vunpack.c.l.b16 %v379
        %v946 = vunpack.c.h.b16 %v379
        %v947 = vunpack.c.l.b16 %v380
        %v948 = vunpack.c.h.b16 %v380
        %v949 = vunpack.c.l.b16 %v381
        %v950 = vunpack.c.h.b16 %v381
        %v951 = vunpack.c.l.b16 %v382
        %v952 = vunpack.c.h.b16 %v382
        %v953 = vunpack.c.l.b16 %v383
        %v954 = vunpack.c.h.b16 %v383
        %v955 = vunpack.c.l.b16 %v384
        %v956 = vunpack.c.h.b16 %v384
        %v957 = vunpack.c.l.b16 %v385
        %v958 = vunpack.c.h.b16 %v385
        %v959 = vunpack.c.l.b16 %v386
        %v960 = vunpack.c.h.b16 %v386
        %v961 = vunpack.c.l.b16 %v387
        %v962 = vunpack.c.h.b16 %v387
        %v963 = vunpack.c.l.b16 %v388
        %v964 = vunpack.c.h.b16 %v388
        %v965 = vunpack.c.l.b16 %v389
        %v966 = vunpack.c.h.b16 %v389
        %v967 = vunpack.c.l.b16 %v390
        %v968 = vunpack.c.h.b16 %v390
        %v969 = vunpack.c.l.b16 %v391
        %v970 = vunpack.c.h.b16 %v391
        %v971 = vunpack.c.l.b16 %v392
        %v972 = vunpack.c.h.b16 %v392
        %v973 = vunpack.c.l.b16 %v393
        %v974 = vunpack.c.h.b16 %v393
        %v975 = vunpack.c.l.b16 %v394
        %v976 = vunpack.c.h.b16 %v394
        %v977 = vunpack.c.l.b16 %v395
        %v978 = vunpack.c.h.b16 %v395
        %v979 = vunpack.c.l.b16 %v396
        %v980 = vunpack.c.h.b16 %v396
        %v981 = vunpack.c.l.b16 %v397
        %v982 = vunpack.c.h.b16 %v397
        %v983 = vunpack.c.l.b16 %v398
        %v984 = vunpack.c.h.b16 %v398
        %v985 = vunpack.c.l.b16 %v399
        %v986 = vunpack.c.h.b16 %v399
        %v987 = vunpack.c.l.b16 %v400
        %v988 = vunpack.c.h.b16 %v400
        %v989 = vunpack.c.l.b16 %v401
        %v990 = vunpack.c.h.b16 %v401
        %v991 = vunpack.c.l.b16 %v402
        %v992 = vunpack.c.h.b16 %v402
        %v993 = vunpack.c.l.b16 %v403
        %v994 = vunpack.c.h.b16 %v403
        %v995 = vunpack.c.l.b16 %v404
        %v996 = vunpack.c.h.b16 %v404
        %v997 = vunpack.c.l.b16 %v405
        %v998 = vunpack.c.h.b16 %v405
        %v999 = vunpack.c.l.b16 %v406
        %v1000 = vunpack.c.h.b16 %v406
        %v1001 = vunpack.c.l.b16 %v407
        %v1002 = vunpack.c.h.b16 %v407
        %v1003 = vunpack.c.l.b16 %v408
        %v1004 = vunpack.c.h.b16 %v408
        %v1005 = vunpack.c.l.b16 %v409
        %v1006 = vunpack.c.h.b16 %v409
        %v1007 = vunpack.c.l.b16 %v410
        %v1008 = vunpack.c.h.b16 %v410
        %v1009 = vunpack.c.l.b16 %v411
        %v1010 = vunpack.c.h.b16 %v411
        %v1011 = vunpack.c.l.b16 %v412
        %v1012 = vunpack.c.h.b16 %v412
        %v1013 = vunpack.c.l.b16 %v413
        %v1014 = vunpack.c.h.b16 %v413
        %v1015 = vunpack.c.l.b16 %v414
        %v1016 = vunpack.c.h.b16 %v414
        %v1017 = vunpack.c.l.b16 %v415
        %v1018 = vunpack.c.h.b16 %v415
        %v1019 = vunpack.c.l.b16 %v416
        %v1020 = vunpack.c.h.b16 %v416
        %v1021 = vunpack.c.l.b16 %v417
        %v1022 = vunpack.c.h.b16 %v417
        %v1023 = vunpack.c.l.b16 %v418
        %v1024 = vunpack.c.h.b16 %v418
        %v1025 = vunpack.c.l.b16 %v419
        %v1026 = vunpack.c.h.b16 %v419
        %v1027 = vunpack.c.l.b16 %v420
        %v1028 = vunpack.c.h.b16 %v420
        %v1029 = vunpack.c.l.b16 %v421
        %v1030 = vunpack.c.h.b16 %v421
        %v1031 = vunpack.c.l.b16 %v422
        %v1032 = vunpack.c.h.b16 %v422
        %v1033 = vunpack.c.l.b16 %v423
        %v1034 = vunpack.c.h.b16 %v423
        %v1035 = vunpack.c.l.b16 %v424
        %v1036 = vunpack.c.h.b16 %v424
        %v1037 = vunpack.c.l.b16 %v425
        %v1038 = vunpack.c.h.b16 %v425
        %v1039 = vunpack.c.l.b16 %v426
        %v1040 = vunpack.c.h.b16 %v426
        %v1041 = vunpack.c.l.b16 %v427
        %v1042 = vunpack.c.h.b16 %v427
        %v1043 = vunpack.c.l.b16 %v428
        %v1044 = vunpack.c.h.b16 %v428
        %v1045 = vunpack.c.l.b16 %v429
        %v1046 = vunpack.c.h.b16 %v429
        %v1047 = vunpack.c.l.b16 %v430
        %v1048 = vunpack.c.h.b16 %v430
        %v1049 = vunpack.c.l.b16 %v431
        %v1050 = vunpack.c.h.b16 %v431
        %v1051 = vunpack.c.l.b16 %v432
        %v1052 = vunpack.c.h.b16 %v432
        %v1053 = vunpack.c.l.b16 %v433
        %v1054 = vunpack.c.h.b16 %v433
        %v1055 = vunpack.c.l.b16 %v434
        %v1056 = vunpack.c.h.b16 %v434
        %v1057 = vunpack.c.l.b16 %v435
        %v1058 = vunpack.c.h.b16 %v435
        %v1059 = vunpack.c.l.b16 %v436
        %v1060 = vunpack.c.h.b16 %v436
        %v1061 = vunpack.c.l.b16 %v437
        %v1062 = vunpack.c.h.b16 %v437
        %v1063 = vunpack.c.l.b16 %v438
        %v1064 = vunpack.c.h.b16 %v438
        %v1065 = vunpack.c.l.b16 %v439
        %v1066 = vunpack.c.h.b16 %v439
        %v1067 = vunpack.c.l.b16 %v440
        %v1068 = vunpack.c.h.b16 %v440
        %v1069 = vunpack.c.l.b16 %v441
        %v1070 = vunpack.c.h.b16 %v441
        %v1071 = vunpack.c.l.b16 %v442
        %v1072 = vunpack.c.h.b16 %v442
        %v1073 = vunpack.c.l.b16 %v443
        %v1074 = vunpack.c.h.b16 %v443
        %v1075 = vunpack.c.l.b16 %v444
        %v1076 = vunpack.c.h.b16 %v444
        %v1077 = vunpack.c.l.b16 %v445
        %v1078 = vunpack.c.h.b16 %v445
        %v1079 = vunpack.c.l.b16 %v446
        %v1080 = vunpack.c.h.b16 %v446
        %v1081 = vunpack.c.l.b16 %v447
        %v1082 = vunpack.c.h.b16 %v447
        %v1083 = vunpack.c.l.b16 %v448
        %v1084 = vunpack.c.h.b16 %v448
        %v1085 = vunpack.c.l.b16 %v449
        %v1086 = vunpack.c.h.b16 %v449
        %v1087 = vunpack.c.l.b16 %v450
        %v1088 = vunpack.c.h.b16 %v450
        %v1089 = vunpack.c.l.b16 %v451
        %v1090 = vunpack.c.h.b16 %v451
        %v1091 = vunpack.c.l.b16 %v452
        %v1092 = vunpack.c.h.b16 %v452
        %v1093 = vunpack.c.l.b16 %v453
        %v1094 = vunpack.c.h.b16 %v453
        %v1095 = vunpack.c.l.b16 %v454
        %v1096 = vunpack.c.h.b16 %v454
        %v1097 = vunpack.c.l.b16 %v455
        %v1098 = vunpack.c.h.b16 %v455
        %v1099 = vunpack.c.l.b16 %v456
        %v1100 = vunpack.c.h.b16 %v456
        %v1101 = vunpack.c.l.b16 %v457
        %v1102 = vunpack.c.h.b16 %v457
        %v1103 = vunpack.c.l.b16 %v458
        %v1104 = vunpack.c.h.b16 %v458
        %v1105 = vunpack.c.l.b16 %v459
        %v1106 = vunpack.c.h.b16 %v459
        %v1107 = vunpack.c.l.b16 %v460
        %v1108 = vunpack.c.h.b16 %v460
        %v1109 = vunpack.c.l.b16 %v461
        %v1110 = vunpack.c.h.b16 %v461
        %v1111 = vunpack.c.l.b16 %v462
        %v1112 = vunpack.c.h.b16 %v462
        %v1113 = vunpack.c.l.b16 %v463
        %v1114 = vunpack.c.h.b16 %v463
        %v1115 = vunpack.c.l.b16 %v464
        %v1116 = vunpack.c.h.b16 %v464
        %v1117 = vunpack.c.l.b16 %v465
        %v1118 = vunpack.c.h.b16 %v465
        %v1119 = vunpack.c.l.b16 %v466
        %v1120 = vunpack.c.h.b16 %v466
        %v1121 = vunpack.c.l.b16 %v467
        %v1122 = vunpack.c.h.b16 %v467
        %v1123 = vunpack.c.l.b16 %v468
        %v1124 = vunpack.c.h.b16 %v468
        %v1125 = vunpack.c.l.b16 %v469
        %v1126 = vunpack.c.h.b16 %v469
        %v1127 = vunpack.c.l.b16 %v470
        %v1128 = vunpack.c.h.b16 %v470
        %v1129 = vpack.c.b16 %v749, %v745
        %v1130 = vpack.c.b16 %v750, %v746
        %v1131 = vpack.c.b16 %v751, %v747
        %v1132 = vpack.c.b16 %v752, %v748
        %v1133 = vpack.c.b16 %v757, %v753
        %v1134 = vpack.c.b16 %v758, %v754
        %v1135 = vpack.c.b16 %v759, %v755
        %v1136 = vpack.c.b16 %v760, %v756
        %v1137 = vpack.c.b16 %v765, %v761
        %v1138 = vpack.c.b16 %v766, %v762
        %v1139 = vpack.c.b16 %v767, %v763
        %v1140 = vpack.c.b16 %v768, %v764
        %v1141 = vpack.c.b16 %v773, %v769
        %v1142 = vpack.c.b16 %v774, %v770
        %v1143 = vpack.c.b16 %v775, %v771
        %v1144 = vpack.c.b16 %v776, %v772
        %v1145 = vpack.c.b16 %v781, %v777
        %v1146 = vpack.c.b16 %v782, %v778
        %v1147 = vpack.c.b16 %v783, %v779
        %v1148 = vpack.c.b16 %v784, %v780
        %v1149 = vpack.c.b16 %v789, %v785
        %v1150 = vpack.c.b16 %v790, %v786
        %v1151 = vpack.c.b16 %v791, %v787
        %v1152 = vpack.c.b16 %v792, %v788
        %v1153 = vpack.c.b16 %v797, %v793
        %v1154 = vpack.c.b16 %v798, %v794
        %v1155 = vpack.c.b16 %v799, %v795
        %v1156 = vpack.c.b16 %v800, %v796
        %v1157 = vpack.c.b16 %v805, %v801
        %v1158 = vpack.c.b16 %v806, %v802
        %v1159 = vpack.c.b16 %v807, %v803
        %v1160 = vpack.c.b16 %v808, %v804
        %v1161 = vpack.c.b16 %v813, %v809
        %v1162 = vpack.c.b16 %v814, %v810
        %v1163 = vpack.c.b16 %v815, %v811
        %v1164 = vpack.c.b16 %v816, %v812
        %v1165 = vpack.c.b16 %v821, %v817
        %v1166 = vpack.c.b16 %v822, %v818
        %v1167 = vpack.c.b16 %v823, %v819
        %v1168 = vpack.c.b16 %v824, %v820
        %v1169 = vpack.c.b16 %v829, %v825
        %v1170 = vpack.c.b16 %v830, %v826
        %v1171 = vpack.c.b16 %v831, %v827
        %v1172 = vpack.c.b16 %v832, %v828
        %v1173 = vpack.c.b16 %v837, %v833
        %v1174 = vpack.c.b16 %v838, %v834
        %v1175 = vpack.c.b16 %v839, %v835
        %v1176 = vpack.c.b16 %v840, %v836
        %v1177 = vpack.c.b16 %v845, %v841
        %v1178 = vpack.c.b16 %v846, %v842
        %v1179 = vpack.c.b16 %v847, %v843
        %v1180 = vpack.c.b16 %v848, %v844
        %v1181 = vpack.c.b16 %v853, %v849
        %v1182 = vpack.c.b16 %v854, %v850
        %v1183 = vpack.c.b16 %v855, %v851
        %v1184 = vpack.c.b16 %v856, %v852
        %v1185 = vpack.c.b16 %v861, %v857
        %v1186 = vpack.c.b16 %v862, %v858
        %v1187 = vpack.c.b16 %v863, %v859
        %v1188 = vpack.c.b16 %v864, %v860
        %v1189 = vpack.c.b16 %v869, %v865
        %v1190 = vpack.c.b16 %v870, %v866
        %v1191 = vpack.c.b16 %v871, %v867
        %v1192 = vpack.c.b16 %v872, %v868
        %v1193 = vpack.c.b16 %v877, %v873
        %v1194 = vpack.c.b16 %v878, %v874
        %v1195 = vpack.c.b16 %v879, %v875
        %v1196 = vpack.c.b16 %v880, %v876
        %v1197 = vpack.c.b16 %v885, %v881
        %v1198 = vpack.c.b16 %v886, %v882
        %v1199 = vpack.c.b16 %v887, %v883
        %v1200 = vpack.c.b16 %v888, %v884
        %v1201 = vpack.c.b16 %v893, %v889
        %v1202 = vpack.c.b16 %v894, %v890
        %v1203 = vpack.c.b16 %v895, %v891
        %v1204 = vpack.c.b16 %v896, %v892
        %v1205 = vpack.c.b16 %v901, %v897
        %v1206 = vpack.c.b16 %v902, %v898
        %v1207 = vpack.c.b16 %v903, %v899
        %v1208 = vpack.c.b16 %v904, %v900
        %v1209 = vpack.c.b16 %v909, %v905
        %v1210 = vpack.c.b16 %v910, %v906
        %v1211 = vpack.c.b16 %v911, %v907
        %v1212 = vpack.c.b16 %v912, %v908
        %v1213 = vpack.c.b16 %v917, %v913
        %v1214 = vpack.c.b16 %v918, %v914
        %v1215 = vpack.c.b16 %v919, %v915
        %v1216 = vpack.c.b16 %v920, %v916
        %v1217 = vpack.c.b16 %v925, %v921
        %v1218 = vpack.c.b16 %v926, %v922
        %v1219 = vpack.c.b16 %v927, %v923
        %v1220 = vpack.c.b16 %v928, %v924
        %v1221 = vpack.c.b16 %v933, %v929
        %v1222 = vpack.c.b16 %v934, %v930
        %v1223 = vpack.c.b16 %v935, %v931
        %v1224 = vpack.c.b16 %v936, %v932
        %v1225 = vpack.c.b16 %v941, %v937
        %v1226 = vpack.c.b16 %v942, %v938
        %v1227 = vpack.c.b16 %v943, %v939
        %v1228 = vpack.c.b16 %v944, %v940
        %v1229 = vpack.c.b16 %v949, %v945
        %v1230 = vpack.c.b16 %v950, %v946
        %v1231 = vpack.c.b16 %v951, %v947
        %v1232 = vpack.c.b16 %v952, %v948
        %v1233 = vpack.c.b16 %v957, %v953
        %v1234 = vpack.c.b16 %v958, %v954
        %v1235 = vpack.c.b16 %v959, %v955
        %v1236 = vpack.c.b16 %v960, %v956
        %v1237 = vpack.c.b16 %v965, %v961
        %v1238 = vpack.c.b16 %v966, %v962
        %v1239 = vpack.c.b16 %v967, %v963
        %v1240 = vpack.c.b16 %v968, %v964
        %v1241 = vpack.c.b16 %v973, %v969
        %v1242 = vpack.c.b16 %v974, %v970
        %v1243 = vpack.c.b16 %v975, %v971
        %v1244 = vpack.c.b16 %v976, %v972
        %v1245 = vpack.c.b16 %v981, %v977
        %v1246 = vpack.c.b16 %v982, %v978
        %v1247 = vpack.c.b16 %v983, %v979
        %v1248 = vpack.c.b16 %v984, %v980
        %v1249 = vpack.c.b16 %v989, %v985
        %v1250 = vpack.c.b16 %v990, %v986
        %v1251 = vpack.c.b16 %v991, %v987
        %v1252 = vpack.c.b16 %v992, %v988
        %v1253 = vpack.c.b16 %v997, %v993
        %v1254 = vpack.c.b16 %v998, %v994
        %v1255 = vpack.c.b16 %v999, %v995
        %v1256 = vpack.c.b16 %v1000, %v996
        %v1257 = vpack.c.b16 %v1005, %v1001
        %v1258 = vpack.c.b16 %v1006, %v1002
        %v1259 = vpack.c.b16 %v1007, %v1003
        %v1260 = vpack.c.b16 %v1008, %v1004
        %v1261 = vpack.c.b16 %v1013, %v1009
        %v1262 = vpack.c.b16 %v1014, %v1010
        %v1263 = vpack.c.b16 %v1015, %v1011
        %v1264 = vpack.c.b16 %v1016, %v1012
        %v1265 = vpack.c.b16 %v1021, %v1017
        %v1266 = vpack.c.b16 %v1022, %v1018
        %v1267 = vpack.c.b16 %v1023, %v1019
        %v1268 = vpack.c.b16 %v1024, %v1020
        %v1269 = vpack.c.b16 %v1029, %v1025
        %v1270 = vpack.c.b16 %v1030, %v1026
        %v1271 = vpack.c.b16 %v1031, %v1027
        %v1272 = vpack.c.b16 %v1032, %v1028
        %v1273 = vpack.c.b16 %v1037, %v1033
        %v1274 = vpack.c.b16 %v1038, %v1034
        %v1275 = vpack.c.b16 %v1039, %v1035
        %v1276 = vpack.c.b16 %v1040, %v1036
        %v1277 = vpack.c.b16 %v1045, %v1041
        %v1278 = vpack.c.b16 %v1046, %v1042
        %v1279 = vpack.c.b16 %v1047, %v1043
        %v1280 = vpack.c.b16 %v1048, %v1044
        %v1281 = vpack.c.b16 %v1053, %v1049
        %v1282 = vpack.c.b16 %v1054, %v1050
        %v1283 = vpack.c.b16 %v1055, %v1051
        %v1284 = vpack.c.b16 %v1056, %v1052
        %v1285 = vpack.c.b16 %v1061, %v1057
        %v1286 = vpack.c.b16 %v1062, %v1058
        %v1287 = vpack.c.b16 %v1063, %v1059
        %v1288 = vpack.c.b16 %v1064, %v1060
        %v1289 = vpack.c.b16 %v1069, %v1065
        %v1290 = vpack.c.b16 %v1070, %v1066
        %v1291 = vpack.c.b16 %v1071, %v1067
        %v1292 = vpack.c.b16 %v1072, %v1068
        %v1293 = vpack.c.b16 %v1077, %v1073
        %v1294 = vpack.c.b16 %v1078, %v1074
        %v1295 = vpack.c.b16 %v1079, %v1075
        %v1296 = vpack.c.b16 %v1080, %v1076
        %v1297 = vpack.c.b16 %v1085, %v1081
        %v1298 = vpack.c.b16 %v1086, %v1082
        %v1299 = vpack.c.b16 %v1087, %v1083
        %v1300 = vpack.c.b16 %v1088, %v1084
        %v1301 = vpack.c.b16 %v1093, %v1089
        %v1302 = vpack.c.b16 %v1094, %v1090
        %v1303 = vpack.c.b16 %v1095, %v1091
        %v1304 = vpack.c.b16 %v1096, %v1092
        %v1305 = vpack.c.b16 %v1101, %v1097
        %v1306 = vpack.c.b16 %v1102, %v1098
        %v1307 = vpack.c.b16 %v1103, %v1099
        %v1308 = vpack.c.b16 %v1104, %v1100
        %v1309 = vpack.c.b16 %v1109, %v1105
        %v1310 = vpack.c.b16 %v1110, %v1106
        %v1311 = vpack.c.b16 %v1111, %v1107
        %v1312 = vpack.c.b16 %v1112, %v1108
        %v1313 = vpack.c.b16 %v1117, %v1113
        %v1314 = vpack.c.b16 %v1118, %v1114
        %v1315 = vpack.c.b16 %v1119, %v1115
        %v1316 = vpack.c.b16 %v1120, %v1116
        %v1317 = vpack.c.b16 %v1125, %v1121
        %v1318 = vpack.c.b16 %v1126, %v1122
        %v1319 = vpack.c.b16 %v1127, %v1123
        %v1320 = vpack.c.b16 %v1128, %v1124
        %1513 = vmatprep.subr.bf16.mxu0 %v1158
        %1514 = vmatpush1.bf16.msra.mxu0 %v1157
        %1515 = vmatprep.subr.bf16.mxu0 %v1154
        %1516 = vmatpush1.bf16.msra.mxu0 %v1153
        %1517 = vmatprep.subr.bf16.mxu0 %v1150
        %1518 = vmatpush1.bf16.msra.mxu0 %v1149
        %1519 = vmatprep.subr.bf16.mxu0 %v1146
        %1520 = vmatpush1.bf16.msra.mxu0 %v1145
        %1521 = vmatprep.subr.bf16.mxu0 %v1142
        %1522 = vmatpush1.bf16.msra.mxu0 %v1141
        %1523 = vmatprep.subr.bf16.mxu0 %v1138
        %1524 = vmatpush1.bf16.msra.mxu0 %v1137
        %1525 = vmatprep.subr.bf16.mxu0 %v1134
        %1526 = vmatpush1.bf16.msra.mxu0 %v1133
        %1527 = vmatprep.subr.bf16.mxu0 %v1130
        %1528 = vmatpush1.bf16.msra.mxu0 %v1129
        %1529 = vmatprep.subr.bf16.mxu0 %v1190
        %1530 = vmatpush2.bf16.msra.mxu0 %v1189
        %1531 = vmatprep.subr.bf16.mxu0 %v1186
        %1532 = vmatpush2.bf16.msra.mxu0 %v1185
        %1533 = vmatprep.subr.bf16.mxu0 %v1182
        %1534 = vmatpush2.bf16.msra.mxu0 %v1181
        %1535 = vmatprep.subr.bf16.mxu0 %v1178
        %1536 = vmatpush2.bf16.msra.mxu0 %v1177
        %1537 = vmatprep.subr.bf16.mxu0 %v1174
        %1538 = vmatpush2.bf16.msra.mxu0 %v1173
        %1539 = vmatprep.subr.bf16.mxu0 %v1170
        %1540 = vmatpush2.bf16.msra.mxu0 %v1169
        %1541 = vmatprep.subr.bf16.mxu0 %v1166
        %1542 = vmatpush2.bf16.msra.mxu0 %v1165
        %1543 = vmatprep.subr.bf16.mxu0 %v1162
        %1544 = vmatpush2.bf16.msra.mxu0 %v1161
        %1545 = vmatprep.mubr.bf16.mxu0 %v530
        %1546 = vmatmul.mubr.bf16.gmra.mxu0 %v529
        %v1547 = vpop.f32.mrf.mxu0
        %v1548 = vadd.f32 %v476, %v1547
        %v1549 = vpop.f32.mrf.mxu0
        %v1550 = vadd.f32 %v480, %v1549
        %v1551 = vpop.f32.mrf.mxu0
        %v1552 = vadd.f32 %v476, %v1551
        %v1553 = vpop.f32.mrf.mxu0
        %v1554 = vadd.f32 %v480, %v1553
        %1555 = vmatprep.mubr.bf16.mxu0 %v536
        %1556 = vmatmul.mubr.bf16.gmra.mxu0 %v535
        %v1557 = vpop.f32.mrf.mxu0
        %v1558 = vadd.f32 %v476, %v1557
        %v1559 = vpop.f32.mrf.mxu0
        %v1560 = vadd.f32 %v480, %v1559
        %v1561 = vpop.f32.mrf.mxu0
        %v1562 = vadd.f32 %v476, %v1561
        %v1563 = vpop.f32.mrf.mxu0
        %v1564 = vadd.f32 %v480, %v1563
        %1565 = vdwg.mxu0
        %1566 = vmatprep.subr.bf16.mxu0 %v1222
        %1567 = vmatpush1.bf16.msra.mxu0 %v1221
        %1568 = vmatprep.subr.bf16.mxu0 %v1218
        %1569 = vmatpush1.bf16.msra.mxu0 %v1217
        %1570 = vmatprep.subr.bf16.mxu0 %v1214
        %1571 = vmatpush1.bf16.msra.mxu0 %v1213
        %1572 = vmatprep.subr.bf16.mxu0 %v1210
        %1573 = vmatpush1.bf16.msra.mxu0 %v1209
        %1574 = vmatprep.subr.bf16.mxu0 %v1206
        %1575 = vmatpush1.bf16.msra.mxu0 %v1205
        %1576 = vmatprep.subr.bf16.mxu0 %v1202
        %1577 = vmatpush1.bf16.msra.mxu0 %v1201
        %1578 = vmatprep.subr.bf16.mxu0 %v1198
        %1579 = vmatpush1.bf16.msra.mxu0 %v1197
        %1580 = vmatprep.subr.bf16.mxu0 %v1194
        %1581 = vmatpush1.bf16.msra.mxu0 %v1193
        %1582 = vmatprep.subr.bf16.mxu0 %v1254
        %1583 = vmatpush2.bf16.msra.mxu0 %v1253
        %1584 = vmatprep.subr.bf16.mxu0 %v1250
        %1585 = vmatpush2.bf16.msra.mxu0 %v1249
        %1586 = vmatprep.subr.bf16.mxu0 %v1246
        %1587 = vmatpush2.bf16.msra.mxu0 %v1245
        %1588 = vmatprep.subr.bf16.mxu0 %v1242
        %1589 = vmatpush2.bf16.msra.mxu0 %v1241
        %1590 = vmatprep.subr.bf16.mxu0 %v1238
        %1591 = vmatpush2.bf16.msra.mxu0 %v1237
        %1592 = vmatprep.subr.bf16.mxu0 %v1234
        %1593 = vmatpush2.bf16.msra.mxu0 %v1233
        %1594 = vmatprep.subr.bf16.mxu0 %v1230
        %1595 = vmatpush2.bf16.msra.mxu0 %v1229
        %1596 = vmatprep.subr.bf16.mxu0 %v1226
        %1597 = vmatpush2.bf16.msra.mxu0 %v1225
        %1598 = vmatprep.mubr.bf16.mxu0 %v532
        %1599 = vmatmul.mubr.bf16.gmra.mxu0 %v531
        %v1600 = vpop.f32.mrf.mxu0
        %v1601 = vadd.f32 %v1548, %v1600
        %v1602 = vpop.f32.mrf.mxu0
        %v1603 = vadd.f32 %v1550, %v1602
        %v1604 = vpop.f32.mrf.mxu0
        %v1605 = vadd.f32 %v1552, %v1604
        %v1606 = vpop.f32.mrf.mxu0
        %v1607 = vadd.f32 %v1554, %v1606
        %1608 = vmatprep.mubr.bf16.mxu0 %v538
        %1609 = vmatmul.mubr.bf16.gmra.mxu0 %v537
        %v1610 = vpop.f32.mrf.mxu0
        %v1611 = vadd.f32 %v1558, %v1610
        %v1612 = vpop.f32.mrf.mxu0
        %v1613 = vadd.f32 %v1560, %v1612
        %v1614 = vpop.f32.mrf.mxu0
        %v1615 = vadd.f32 %v1562, %v1614
        %v1616 = vpop.f32.mrf.mxu0
        %v1617 = vadd.f32 %v1564, %v1616
        %1618 = vdwg.mxu0
        %1619 = vmatprep.subr.bf16.mxu0 %v1286
        %1620 = vmatpush1.bf16.msra.mxu0 %v1285
        %1621 = vmatprep.subr.bf16.mxu0 %v1282
        %1622 = vmatpush1.bf16.msra.mxu0 %v1281
        %1623 = vmatprep.subr.bf16.mxu0 %v1278
        %1624 = vmatpush1.bf16.msra.mxu0 %v1277
        %1625 = vmatprep.subr.bf16.mxu0 %v1274
        %1626 = vmatpush1.bf16.msra.mxu0 %v1273
        %1627 = vmatprep.subr.bf16.mxu0 %v1270
        %1628 = vmatpush1.bf16.msra.mxu0 %v1269
        %1629 = vmatprep.subr.bf16.mxu0 %v1266
        %1630 = vmatpush1.bf16.msra.mxu0 %v1265
        %1631 = vmatprep.subr.bf16.mxu0 %v1262
        %1632 = vmatpush1.bf16.msra.mxu0 %v1261
        %1633 = vmatprep.subr.bf16.mxu0 %v1258
        %1634 = vmatpush1.bf16.msra.mxu0 %v1257
        %1635 = vmatprep.subr.bf16.mxu0 %v1318
        %1636 = vmatpush2.bf16.msra.mxu0 %v1317
        %1637 = vmatprep.subr.bf16.mxu0 %v1314
        %1638 = vmatpush2.bf16.msra.mxu0 %v1313
        %1639 = vmatprep.subr.bf16.mxu0 %v1310
        %1640 = vmatpush2.bf16.msra.mxu0 %v1309
        %1641 = vmatprep.subr.bf16.mxu0 %v1306
        %1642 = vmatpush2.bf16.msra.mxu0 %v1305
        %1643 = vmatprep.subr.bf16.mxu0 %v1302
        %1644 = vmatpush2.bf16.msra.mxu0 %v1301
        %1645 = vmatprep.subr.bf16.mxu0 %v1298
        %1646 = vmatpush2.bf16.msra.mxu0 %v1297
        %1647 = vmatprep.subr.bf16.mxu0 %v1294
        %1648 = vmatpush2.bf16.msra.mxu0 %v1293
        %1649 = vmatprep.subr.bf16.mxu0 %v1290
        %1650 = vmatpush2.bf16.msra.mxu0 %v1289
        %1651 = vmatprep.mubr.bf16.mxu0 %v534
        %1652 = vmatmul.mubr.bf16.gmra.mxu0 %v533
        %v1653 = vpop.f32.mrf.mxu0
        %v1654 = vadd.f32 %v1601, %v1653
        %v1655 = vpop.f32.mrf.mxu0
        %v1656 = vadd.f32 %v1603, %v1655
        %v1657 = vpop.f32.mrf.mxu0
        %v1658 = vadd.f32 %v1605, %v1657
        %v1659 = vpop.f32.mrf.mxu0
        %v1660 = vadd.f32 %v1607, %v1659
        %1661 = vmatprep.mubr.bf16.mxu0 %v540
        %1662 = vmatmul.mubr.bf16.gmra.mxu0 %v539
        %v1663 = vpop.f32.mrf.mxu0
        %v1664 = vadd.f32 %v1611, %v1663
        %v1665 = vpop.f32.mrf.mxu0
        %v1666 = vadd.f32 %v1613, %v1665
        %v1667 = vpop.f32.mrf.mxu0
        %v1668 = vadd.f32 %v1615, %v1667
        %v1669 = vpop.f32.mrf.mxu0
        %v1670 = vadd.f32 %v1617, %v1669
        %1671 = vdwg.mxu0
        %1672 = vmatprep.subr.bf16.mxu0 %v1160
        %1673 = vmatpush1.bf16.msra.mxu0 %v1159
        %1674 = vmatprep.subr.bf16.mxu0 %v1156
        %1675 = vmatpush1.bf16.msra.mxu0 %v1155
        %1676 = vmatprep.subr.bf16.mxu0 %v1152
        %1677 = vmatpush1.bf16.msra.mxu0 %v1151
        %1678 = vmatprep.subr.bf16.mxu0 %v1148
        %1679 = vmatpush1.bf16.msra.mxu0 %v1147
        %1680 = vmatprep.subr.bf16.mxu0 %v1144
        %1681 = vmatpush1.bf16.msra.mxu0 %v1143
        %1682 = vmatprep.subr.bf16.mxu0 %v1140
        %1683 = vmatpush1.bf16.msra.mxu0 %v1139
        %1684 = vmatprep.subr.bf16.mxu0 %v1136
        %1685 = vmatpush1.bf16.msra.mxu0 %v1135
        %1686 = vmatprep.subr.bf16.mxu0 %v1132
        %1687 = vmatpush1.bf16.msra.mxu0 %v1131
        %1688 = vmatprep.subr.bf16.mxu0 %v1192
        %1689 = vmatpush2.bf16.msra.mxu0 %v1191
        %1690 = vmatprep.subr.bf16.mxu0 %v1188
        %1691 = vmatpush2.bf16.msra.mxu0 %v1187
        %1692 = vmatprep.subr.bf16.mxu0 %v1184
        %1693 = vmatpush2.bf16.msra.mxu0 %v1183
        %1694 = vmatprep.subr.bf16.mxu0 %v1180
        %1695 = vmatpush2.bf16.msra.mxu0 %v1179
        %1696 = vmatprep.subr.bf16.mxu0 %v1176
        %1697 = vmatpush2.bf16.msra.mxu0 %v1175
        %1698 = vmatprep.subr.bf16.mxu0 %v1172
        %1699 = vmatpush2.bf16.msra.mxu0 %v1171
        %1700 = vmatprep.subr.bf16.mxu0 %v1168
        %1701 = vmatpush2.bf16.msra.mxu0 %v1167
        %1702 = vmatprep.subr.bf16.mxu0 %v1164
        %1703 = vmatpush2.bf16.msra.mxu0 %v1163
        %1704 = vmatprep.mubr.bf16.mxu0 %v530
        %1705 = vmatmul.mubr.bf16.gmra.mxu0 %v529
        %v1706 = vpop.f32.mrf.mxu0
        %v1707 = vadd.f32 %v484, %v1706
        %v1708 = vpop.f32.mrf.mxu0
        %v1709 = vadd.f32 %v488, %v1708
        %v1710 = vpop.f32.mrf.mxu0
        %v1711 = vadd.f32 %v484, %v1710
        %v1712 = vpop.f32.mrf.mxu0
        %v1713 = vadd.f32 %v488, %v1712
        %1714 = vmatprep.mubr.bf16.mxu0 %v536
        %1715 = vmatmul.mubr.bf16.gmra.mxu0 %v535
        %v1716 = vpop.f32.mrf.mxu0
        %v1717 = vadd.f32 %v484, %v1716
        %v1718 = vpop.f32.mrf.mxu0
        %v1719 = vadd.f32 %v488, %v1718
        %v1720 = vpop.f32.mrf.mxu0
        %v1721 = vadd.f32 %v484, %v1720
        %v1722 = vpop.f32.mrf.mxu0
        %v1723 = vadd.f32 %v488, %v1722
        %1724 = vdwg.mxu0
        %1725 = vmatprep.subr.bf16.mxu0 %v1224
        %1726 = vmatpush1.bf16.msra.mxu0 %v1223
        %1727 = vmatprep.subr.bf16.mxu0 %v1220
        %1728 = vmatpush1.bf16.msra.mxu0 %v1219
        %1729 = vmatprep.subr.bf16.mxu0 %v1216
        %1730 = vmatpush1.bf16.msra.mxu0 %v1215
        %1731 = vmatprep.subr.bf16.mxu0 %v1212
        %1732 = vmatpush1.bf16.msra.mxu0 %v1211
        %1733 = vmatprep.subr.bf16.mxu0 %v1208
        %1734 = vmatpush1.bf16.msra.mxu0 %v1207
        %1735 = vmatprep.subr.bf16.mxu0 %v1204
        %1736 = vmatpush1.bf16.msra.mxu0 %v1203
        %1737 = vmatprep.subr.bf16.mxu0 %v1200
        %1738 = vmatpush1.bf16.msra.mxu0 %v1199
        %1739 = vmatprep.subr.bf16.mxu0 %v1196
        %1740 = vmatpush1.bf16.msra.mxu0 %v1195
        %1741 = vmatprep.subr.bf16.mxu0 %v1256
        %1742 = vmatpush2.bf16.msra.mxu0 %v1255
        %1743 = vmatprep.subr.bf16.mxu0 %v1252
        %1744 = vmatpush2.bf16.msra.mxu0 %v1251
        %1745 = vmatprep.subr.bf16.mxu0 %v1248
        %1746 = vmatpush2.bf16.msra.mxu0 %v1247
        %1747 = vmatprep.subr.bf16.mxu0 %v1244
        %1748 = vmatpush2.bf16.msra.mxu0 %v1243
        %1749 = vmatprep.subr.bf16.mxu0 %v1240
        %1750 = vmatpush2.bf16.msra.mxu0 %v1239
        %1751 = vmatprep.subr.bf16.mxu0 %v1236
        %1752 = vmatpush2.bf16.msra.mxu0 %v1235
        %1753 = vmatprep.subr.bf16.mxu0 %v1232
        %1754 = vmatpush2.bf16.msra.mxu0 %v1231
        %1755 = vmatprep.subr.bf16.mxu0 %v1228
        %1756 = vmatpush2.bf16.msra.mxu0 %v1227
        %1757 = vmatprep.mubr.bf16.mxu0 %v532
        %1758 = vmatmul.mubr.bf16.gmra.mxu0 %v531
        %v1759 = vpop.f32.mrf.mxu0
        %v1760 = vadd.f32 %v1707, %v1759
        %v1761 = vpop.f32.mrf.mxu0
        %v1762 = vadd.f32 %v1709, %v1761
        %v1763 = vpop.f32.mrf.mxu0
        %v1764 = vadd.f32 %v1711, %v1763
        %v1765 = vpop.f32.mrf.mxu0
        %v1766 = vadd.f32 %v1713, %v1765
        %1767 = vmatprep.mubr.bf16.mxu0 %v538
        %1768 = vmatmul.mubr.bf16.gmra.mxu0 %v537
        %v1769 = vpop.f32.mrf.mxu0
        %v1770 = vadd.f32 %v1717, %v1769
        %v1771 = vpop.f32.mrf.mxu0
        %v1772 = vadd.f32 %v1719, %v1771
        %v1773 = vpop.f32.mrf.mxu0
        %v1774 = vadd.f32 %v1721, %v1773
        %v1775 = vpop.f32.mrf.mxu0
        %v1776 = vadd.f32 %v1723, %v1775
        %1777 = vdwg.mxu0
        %1778 = vmatprep.subr.bf16.mxu0 %v1288
        %1779 = vmatpush1.bf16.msra.mxu0 %v1287
        %1780 = vmatprep.subr.bf16.mxu0 %v1284
        %1781 = vmatpush1.bf16.msra.mxu0 %v1283
        %1782 = vmatprep.subr.bf16.mxu0 %v1280
        %1783 = vmatpush1.bf16.msra.mxu0 %v1279
        %1784 = vmatprep.subr.bf16.mxu0 %v1276
        %1785 = vmatpush1.bf16.msra.mxu0 %v1275
        %1786 = vmatprep.subr.bf16.mxu0 %v1272
        %1787 = vmatpush1.bf16.msra.mxu0 %v1271
        %1788 = vmatprep.subr.bf16.mxu0 %v1268
        %1789 = vmatpush1.bf16.msra.mxu0 %v1267
        %1790 = vmatprep.subr.bf16.mxu0 %v1264
        %1791 = vmatpush1.bf16.msra.mxu0 %v1263
        %1792 = vmatprep.subr.bf16.mxu0 %v1260
        %1793 = vmatpush1.bf16.msra.mxu0 %v1259
        %1794 = vmatprep.subr.bf16.mxu0 %v1320
        %1795 = vmatpush2.bf16.msra.mxu0 %v1319
        %1796 = vmatprep.subr.bf16.mxu0 %v1316
        %1797 = vmatpush2.bf16.msra.mxu0 %v1315
        %1798 = vmatprep.subr.bf16.mxu0 %v1312
        %1799 = vmatpush2.bf16.msra.mxu0 %v1311
        %1800 = vmatprep.subr.bf16.mxu0 %v1308
        %1801 = vmatpush2.bf16.msra.mxu0 %v1307
        %1802 = vmatprep.subr.bf16.mxu0 %v1304
        %1803 = vmatpush2.bf16.msra.mxu0 %v1303
        %1804 = vmatprep.subr.bf16.mxu0 %v1300
        %1805 = vmatpush2.bf16.msra.mxu0 %v1299
        %1806 = vmatprep.subr.bf16.mxu0 %v1296
        %1807 = vmatpush2.bf16.msra.mxu0 %v1295
        %1808 = vmatprep.subr.bf16.mxu0 %v1292
        %1809 = vmatpush2.bf16.msra.mxu0 %v1291
        %1810 = vmatprep.mubr.bf16.mxu0 %v534
        %1811 = vmatmul.mubr.bf16.gmra.mxu0 %v533
        %v1812 = vpop.f32.mrf.mxu0
        %v1813 = vadd.f32 %v1760, %v1812
        %v1814 = vpop.f32.mrf.mxu0
        %v1815 = vadd.f32 %v1762, %v1814
        %v1816 = vpop.f32.mrf.mxu0
        %v1817 = vadd.f32 %v1764, %v1816
        %v1818 = vpop.f32.mrf.mxu0
        %v1819 = vadd.f32 %v1766, %v1818
        %1820 = vmatprep.mubr.bf16.mxu0 %v540
        %1821 = vmatmul.mubr.bf16.gmra.mxu0 %v539
        %v1822 = vpop.f32.mrf.mxu0
        %v1823 = vadd.f32 %v1770, %v1822
        %v1824 = vpop.f32.mrf.mxu0
        %v1825 = vadd.f32 %v1772, %v1824
        %v1826 = vpop.f32.mrf.mxu0
        %v1827 = vadd.f32 %v1774, %v1826
        %v1828 = vpop.f32.mrf.mxu0
        %v1829 = vadd.f32 %v1776, %v1828
        %1830 = vdwg.mxu0
        %1831 = vst [vmem:[#allocation2] sm:$0xff] %v1654
        %1832 = vst [vmem:[#allocation2 + $0x8] sm:$0xff] %v1656
        %1833 = vst [vmem:[#allocation2 + $0x10] sm:$0xff] %v1813
        %1834 = vst [vmem:[#allocation2 + $0x18] sm:$0xff] %v1815
        %1835 = vst [vmem:[#allocation2 + $0x20] sm:$0xff] %v1658
        %1836 = vst [vmem:[#allocation2 + $0x28] sm:$0xff] %v1660
        %1837 = vst [vmem:[#allocation2 + $0x30] sm:$0xff] %v1817
        %1838 = vst [vmem:[#allocation2 + $0x38] sm:$0xff] %v1819
        %1839 = vst [vmem:[#allocation2 + $0x40] sm:$0xff] %v1664
        %1840 = vst [vmem:[#allocation2 + $0x48] sm:$0xff] %v1666
        %1841 = vst [vmem:[#allocation2 + $0x50] sm:$0xff] %v1823
        %1842 = vst [vmem:[#allocation2 + $0x58] sm:$0xff] %v1825
        %1843 = vst [vmem:[#allocation2 + $0x60] sm:$0xff] %v1668
        %1844 = vst [vmem:[#allocation2 + $0x68] sm:$0xff] %v1670
        %1845 = vst [vmem:[#allocation2 + $0x70] sm:$0xff] %v1827
        %1846 = vst [vmem:[#allocation2 + $0x78] sm:$0xff] %v1829
        %v1847 = vld [vmem:[#allocation11] sm:$0xff]
        %v1848 = vld [vmem:[#allocation11 + $0x8] sm:$0xff]
        %v1849 = vld [vmem:[#allocation11 + $0x10] sm:$0xff]
        %v1850 = vld [vmem:[#allocation11 + $0x18] sm:$0xff]
        %v1851 = vld [vmem:[#allocation11 + $0x20] sm:$0xff]
        %v1852 = vld [vmem:[#allocation11 + $0x28] sm:$0xff]
        %v1853 = vld [vmem:[#allocation11 + $0x30] sm:$0xff]
        %v1854 = vld [vmem:[#allocation11 + $0x38] sm:$0xff]
        %v1855 = vld [vmem:[#allocation11 + $0x40] sm:$0xff]
        %v1856 = vld [vmem:[#allocation11 + $0x48] sm:$0xff]
        %v1857 = vld [vmem:[#allocation11 + $0x50] sm:$0xff]
        %v1858 = vld [vmem:[#allocation11 + $0x58] sm:$0xff]
        %v1859 = vld [vmem:[#allocation11 + $0x60] sm:$0xff]
        %v1860 = vld [vmem:[#allocation11 + $0x68] sm:$0xff]
        %v1861 = vld [vmem:[#allocation11 + $0x70] sm:$0xff]
        %v1862 = vld [vmem:[#allocation11 + $0x78] sm:$0xff]
        %v1863 = vld [vmem:[#allocation11 + $0x80] sm:$0xff]
        %v1864 = vld [vmem:[#allocation11 + $0x88] sm:$0xff]
        %v1865 = vld [vmem:[#allocation11 + $0x90] sm:$0xff]
        %v1866 = vld [vmem:[#allocation11 + $0x98] sm:$0xff]
        %v1867 = vld [vmem:[#allocation11 + $0xa0] sm:$0xff]
        %v1868 = vld [vmem:[#allocation11 + $0xa8] sm:$0xff]
        %v1869 = vld [vmem:[#allocation11 + $0xb0] sm:$0xff]
        %v1870 = vld [vmem:[#allocation11 + $0xb8] sm:$0xff]
        %v1871 = vld [vmem:[#allocation11 + $0xc0] sm:$0xff]
        %v1872 = vld [vmem:[#allocation11 + $0xc8] sm:$0xff]
        %v1873 = vld [vmem:[#allocation11 + $0xd0] sm:$0xff]
        %v1874 = vld [vmem:[#allocation11 + $0xd8] sm:$0xff]
        %v1875 = vld [vmem:[#allocation11 + $0xe0] sm:$0xff]
        %v1876 = vld [vmem:[#allocation11 + $0xe8] sm:$0xff]
        %v1877 = vld [vmem:[#allocation11 + $0xf0] sm:$0xff]
        %v1878 = vld [vmem:[#allocation11 + $0xf8] sm:$0xff]
        %v1879 = vld [vmem:[#allocation11 + $0x100] sm:$0xff]
        %v1880 = vld [vmem:[#allocation11 + $0x108] sm:$0xff]
        %v1881 = vld [vmem:[#allocation11 + $0x110] sm:$0xff]
        %v1882 = vld [vmem:[#allocation11 + $0x118] sm:$0xff]
        %v1883 = vld [vmem:[#allocation11 + $0x120] sm:$0xff]
        %v1884 = vld [vmem:[#allocation11 + $0x128] sm:$0xff]
        %v1885 = vld [vmem:[#allocation11 + $0x130] sm:$0xff]
        %v1886 = vld [vmem:[#allocation11 + $0x138] sm:$0xff]
        %v1887 = vld [vmem:[#allocation11 + $0x140] sm:$0xff]
        %v1888 = vld [vmem:[#allocation11 + $0x148] sm:$0xff]
        %v1889 = vld [vmem:[#allocation11 + $0x150] sm:$0xff]
        %v1890 = vld [vmem:[#allocation11 + $0x158] sm:$0xff]
        %v1891 = vld [vmem:[#allocation11 + $0x160] sm:$0xff]
        %v1892 = vld [vmem:[#allocation11 + $0x168] sm:$0xff]
        %v1893 = vld [vmem:[#allocation11 + $0x170] sm:$0xff]
        %v1894 = vld [vmem:[#allocation11 + $0x178] sm:$0xff]
        %v1895 = vld [vmem:[#allocation11 + $0x180] sm:$0xff]
        %v1896 = vld [vmem:[#allocation11 + $0x188] sm:$0xff]
        %v1897 = vld [vmem:[#allocation11 + $0x190] sm:$0xff]
        %v1898 = vld [vmem:[#allocation11 + $0x198] sm:$0xff]
        %v1899 = vld [vmem:[#allocation11 + $0x1a0] sm:$0xff]
        %v1900 = vld [vmem:[#allocation11 + $0x1a8] sm:$0xff]
        %v1901 = vld [vmem:[#allocation11 + $0x1b0] sm:$0xff]
        %v1902 = vld [vmem:[#allocation11 + $0x1b8] sm:$0xff]
        %v1903 = vld [vmem:[#allocation11 + $0x1c0] sm:$0xff]
        %v1904 = vld [vmem:[#allocation11 + $0x1c8] sm:$0xff]
        %v1905 = vld [vmem:[#allocation11 + $0x1d0] sm:$0xff]
        %v1906 = vld [vmem:[#allocation11 + $0x1d8] sm:$0xff]
        %v1907 = vld [vmem:[#allocation11 + $0x1e0] sm:$0xff]
        %v1908 = vld [vmem:[#allocation11 + $0x1e8] sm:$0xff]
        %v1909 = vld [vmem:[#allocation11 + $0x1f0] sm:$0xff]
        %v1910 = vld [vmem:[#allocation11 + $0x1f8] sm:$0xff]
        %v1911 = vld [vmem:[#allocation3] sm:$0xff]
        %v1912 = vld [vmem:[#allocation4] sm:$0xff]
        %s1913 = smul.u32 0, 4
        %s1914 = smul.addr %s1913, 8
        %s1915 = scalar_lea.vmem [#allocation2], %s1914
        %v1916 = vld [vmem:[%s1915] sm:$0xff]
        %v1917 = vld [vmem:[%s1915 + $0x8] sm:$0xff]
        %v1918 = vld [vmem:[%s1915 + $0x10] sm:$0xff]
        %v1919 = vld [vmem:[%s1915 + $0x18] sm:$0xff]
        %1920 = vmatprep.subr.mxu0 %v1908
        %1921 = vmatpush1.msra.mxu0 %v1907
        %1922 = vmatprep.subr.mxu0 %v1904
        %1923 = vmatpush1.msra.mxu0 %v1903
        %1924 = vmatprep.subr.mxu0 %v1900
        %1925 = vmatpush1.msra.mxu0 %v1899
        %1926 = vmatprep.subr.mxu0 %v1896
        %1927 = vmatpush1.msra.mxu0 %v1895
        %1928 = vmatprep.subr.mxu0 %v1892
        %1929 = vmatpush1.msra.mxu0 %v1891
        %1930 = vmatprep.subr.mxu0 %v1888
        %1931 = vmatpush1.msra.mxu0 %v1887
        %1932 = vmatprep.subr.mxu0 %v1884
        %1933 = vmatpush1.msra.mxu0 %v1883
        %1934 = vmatprep.subr.mxu0 %v1880
        %1935 = vmatpush1.msra.mxu0 %v1879
        %1936 = vmatprep.subr.mxu0 %v1876
        %1937 = vmatpush1.msra.mxu0 %v1875
        %1938 = vmatprep.subr.mxu0 %v1872
        %1939 = vmatpush1.msra.mxu0 %v1871
        %1940 = vmatprep.subr.mxu0 %v1868
        %1941 = vmatpush1.msra.mxu0 %v1867
        %1942 = vmatprep.subr.mxu0 %v1864
        %1943 = vmatpush1.msra.mxu0 %v1863
        %1944 = vmatprep.subr.mxu0 %v1860
        %1945 = vmatpush1.msra.mxu0 %v1859
        %1946 = vmatprep.subr.mxu0 %v1856
        %1947 = vmatpush1.msra.mxu0 %v1855
        %1948 = vmatprep.subr.mxu0 %v1852
        %1949 = vmatpush1.msra.mxu0 %v1851
        %1950 = vmatprep.subr.mxu0 %v1848
        %1951 = vmatpush1.msra.mxu0 %v1847
        %1952 = vmatprep.subr.mxu0 0.0
        %1953 = vmatpush2.msra.mxu0 0.0
        %1954 = vmatprep.subr.mxu0 0.0
        %1955 = vmatpush2.msra.mxu0 0.0
        %1956 = vmatprep.subr.mxu0 0.0
        %1957 = vmatpush2.msra.mxu0 0.0
        %1958 = vmatprep.subr.mxu0 0.0
        %1959 = vmatpush2.msra.mxu0 0.0
        %1960 = vmatprep.subr.mxu0 0.0
        %1961 = vmatpush2.msra.mxu0 0.0
        %1962 = vmatprep.subr.mxu0 0.0
        %1963 = vmatpush2.msra.mxu0 0.0
        %1964 = vmatprep.subr.mxu0 0.0
        %1965 = vmatpush2.msra.mxu0 0.0
        %1966 = vmatprep.subr.mxu0 0.0
        %1967 = vmatpush2.msra.mxu0 0.0
        %1968 = vmatprep.subr.mxu0 0.0
        %1969 = vmatpush2.msra.mxu0 0.0
        %1970 = vmatprep.subr.mxu0 0.0
        %1971 = vmatpush2.msra.mxu0 0.0
        %1972 = vmatprep.subr.mxu0 0.0
        %1973 = vmatpush2.msra.mxu0 0.0
        %1974 = vmatprep.subr.mxu0 0.0
        %1975 = vmatpush2.msra.mxu0 0.0
        %1976 = vmatprep.subr.mxu0 0.0
        %1977 = vmatpush2.msra.mxu0 0.0
        %1978 = vmatprep.subr.mxu0 0.0
        %1979 = vmatpush2.msra.mxu0 0.0
        %1980 = vmatprep.subr.mxu0 0.0
        %1981 = vmatpush2.msra.mxu0 0.0
        %1982 = vmatprep.subr.mxu0 0.0
        %1983 = vmatpush2.msra.mxu0 0.0
        %1984 = vmatprep.mubr.f32.mxu0 0.0
        %1985 = vmatmul.mubr.f32.gmra.mxu0 %v1911
        %v1986 = vpop.f32.mrf.mxu0
        %v1987 = vadd.f32 0.0, %v1986
        %v1988 = vpop.f32.mrf.mxu0
        %v1989 = vadd.f32 0.0, %v1988
        %1990 = vdwg.mxu0
        %1991 = vmatprep.subr.mxu0 %v1910
        %1992 = vmatpush1.msra.mxu0 %v1909
        %1993 = vmatprep.subr.mxu0 %v1906
        %1994 = vmatpush1.msra.mxu0 %v1905
        %1995 = vmatprep.subr.mxu0 %v1902
        %1996 = vmatpush1.msra.mxu0 %v1901
        %1997 = vmatprep.subr.mxu0 %v1898
        %1998 = vmatpush1.msra.mxu0 %v1897
        %1999 = vmatprep.subr.mxu0 %v1894
        %2000 = vmatpush1.msra.mxu0 %v1893
        %2001 = vmatprep.subr.mxu0 %v1890
        %2002 = vmatpush1.msra.mxu0 %v1889
        %2003 = vmatprep.subr.mxu0 %v1886
        %2004 = vmatpush1.msra.mxu0 %v1885
        %2005 = vmatprep.subr.mxu0 %v1882
        %2006 = vmatpush1.msra.mxu0 %v1881
        %2007 = vmatprep.subr.mxu0 %v1878
        %2008 = vmatpush1.msra.mxu0 %v1877
        %2009 = vmatprep.subr.mxu0 %v1874
        %2010 = vmatpush1.msra.mxu0 %v1873
        %2011 = vmatprep.subr.mxu0 %v1870
        %2012 = vmatpush1.msra.mxu0 %v1869
        %2013 = vmatprep.subr.mxu0 %v1866
        %2014 = vmatpush1.msra.mxu0 %v1865
        %2015 = vmatprep.subr.mxu0 %v1862
        %2016 = vmatpush1.msra.mxu0 %v1861
        %2017 = vmatprep.subr.mxu0 %v1858
        %2018 = vmatpush1.msra.mxu0 %v1857
        %2019 = vmatprep.subr.mxu0 %v1854
        %2020 = vmatpush1.msra.mxu0 %v1853
        %2021 = vmatprep.subr.mxu0 %v1850
        %2022 = vmatpush1.msra.mxu0 %v1849
        %2023 = vmatprep.subr.mxu0 0.0
        %2024 = vmatpush2.msra.mxu0 0.0
        %2025 = vmatprep.subr.mxu0 0.0
        %2026 = vmatpush2.msra.mxu0 0.0
        %2027 = vmatprep.subr.mxu0 0.0
        %2028 = vmatpush2.msra.mxu0 0.0
        %2029 = vmatprep.subr.mxu0 0.0
        %2030 = vmatpush2.msra.mxu0 0.0
        %2031 = vmatprep.subr.mxu0 0.0
        %2032 = vmatpush2.msra.mxu0 0.0
        %2033 = vmatprep.subr.mxu0 0.0
        %2034 = vmatpush2.msra.mxu0 0.0
        %2035 = vmatprep.subr.mxu0 0.0
        %2036 = vmatpush2.msra.mxu0 0.0
        %2037 = vmatprep.subr.mxu0 0.0
        %2038 = vmatpush2.msra.mxu0 0.0
        %2039 = vmatprep.subr.mxu0 0.0
        %2040 = vmatpush2.msra.mxu0 0.0
        %2041 = vmatprep.subr.mxu0 0.0
        %2042 = vmatpush2.msra.mxu0 0.0
        %2043 = vmatprep.subr.mxu0 0.0
        %2044 = vmatpush2.msra.mxu0 0.0
        %2045 = vmatprep.subr.mxu0 0.0
        %2046 = vmatpush2.msra.mxu0 0.0
        %2047 = vmatprep.subr.mxu0 0.0
        %2048 = vmatpush2.msra.mxu0 0.0
        %2049 = vmatprep.subr.mxu0 0.0
        %2050 = vmatpush2.msra.mxu0 0.0
        %2051 = vmatprep.subr.mxu0 0.0
        %2052 = vmatpush2.msra.mxu0 0.0
        %2053 = vmatprep.subr.mxu0 0.0
        %2054 = vmatpush2.msra.mxu0 0.0
        %2055 = vmatprep.mubr.f32.mxu0 0.0
        %2056 = vmatmul.mubr.f32.gmra.mxu0 %v1911
        %v2057 = vpop.f32.mrf.mxu0
        %v2058 = vadd.f32 0.0, %v2057
        %v2059 = vpop.f32.mrf.mxu0
        %v2060 = vadd.f32 0.0, %v2059
        %2061 = vdwg.mxu0
        %v2062 = vadd.f32 %v1916, %v1987
        %v2063 = vadd.f32 %v1917, %v1989
        %v2064 = vadd.f32 %v1918, %v2058
        %v2065 = vadd.f32 %v1919, %v2060
        %v2066 = vxor.u32 %v2062, 2147483648
        %v2067 = vmul.f32 %v2066, 1.442695
        %v2068 = vpow.pop %v2067
        %v2069 = vadd.f32 %v2068, 1.0
        %v2070 = vrcp.pop %v2069
        %v2071 = vmul.f32 1.0, %v2070
        %v2072 = vxor.u32 %v2063, 2147483648
        %v2073 = vmul.f32 %v2072, 1.442695
        %v2074 = vpow.pop %v2073
        %v2075 = vadd.f32 %v2074, 1.0
        %v2076 = vrcp.pop %v2075
        %v2077 = vmul.f32 1.0, %v2076
        %v2078 = vtanh.pop %v2064
        %v2079 = vxor.u32 %v2065, 2147483648
        %v2080 = vmul.f32 %v2079, 1.442695
        %v2081 = vpow.pop %v2080
        %v2082 = vadd.f32 %v2081, 1.0
        %v2083 = vrcp.pop %v2082
        %v2084 = vmul.f32 1.0, %v2083
        %v2085 = vmul.f32 %v2077, %v1912
        %v2086 = vmul.f32 %v2071, %v2078
        %v2087 = vadd.f32 %v2085, %v2086
        %v2088 = vtanh.pop %v2087
        %v2089 = vmul.f32 %v2084, %v2088
        %2090 = vst [vmem:[%s258] sm:$0xff] %v2089
        %s2091 = smul.u32 1, 4
        %s2092 = smul.addr %s2091, 8
        %s2093 = scalar_lea.vmem [#allocation2], %s2092
        %v2094 = vld [vmem:[%s2093] sm:$0xff]
        %v2095 = vld [vmem:[%s2093 + $0x8] sm:$0xff]
        %v2096 = vld [vmem:[%s2093 + $0x10] sm:$0xff]
        %v2097 = vld [vmem:[%s2093 + $0x18] sm:$0xff]
        %2098 = vmatprep.subr.mxu0 %v1908
        %2099 = vmatpush1.msra.mxu0 %v1907
        %2100 = vmatprep.subr.mxu0 %v1904
        %2101 = vmatpush1.msra.mxu0 %v1903
        %2102 = vmatprep.subr.mxu0 %v1900
        %2103 = vmatpush1.msra.mxu0 %v1899
        %2104 = vmatprep.subr.mxu0 %v1896
        %2105 = vmatpush1.msra.mxu0 %v1895
        %2106 = vmatprep.subr.mxu0 %v1892
        %2107 = vmatpush1.msra.mxu0 %v1891
        %2108 = vmatprep.subr.mxu0 %v1888
        %2109 = vmatpush1.msra.mxu0 %v1887
        %2110 = vmatprep.subr.mxu0 %v1884
        %2111 = vmatpush1.msra.mxu0 %v1883
        %2112 = vmatprep.subr.mxu0 %v1880
        %2113 = vmatpush1.msra.mxu0 %v1879
        %2114 = vmatprep.subr.mxu0 %v1876
        %2115 = vmatpush1.msra.mxu0 %v1875
        %2116 = vmatprep.subr.mxu0 %v1872
        %2117 = vmatpush1.msra.mxu0 %v1871
        %2118 = vmatprep.subr.mxu0 %v1868
        %2119 = vmatpush1.msra.mxu0 %v1867
        %2120 = vmatprep.subr.mxu0 %v1864
        %2121 = vmatpush1.msra.mxu0 %v1863
        %2122 = vmatprep.subr.mxu0 %v1860
        %2123 = vmatpush1.msra.mxu0 %v1859
        %2124 = vmatprep.subr.mxu0 %v1856
        %2125 = vmatpush1.msra.mxu0 %v1855
        %2126 = vmatprep.subr.mxu0 %v1852
        %2127 = vmatpush1.msra.mxu0 %v1851
        %2128 = vmatprep.subr.mxu0 %v1848
        %2129 = vmatpush1.msra.mxu0 %v1847
        %2130 = vmatprep.subr.mxu0 0.0
        %2131 = vmatpush2.msra.mxu0 0.0
        %2132 = vmatprep.subr.mxu0 0.0
        %2133 = vmatpush2.msra.mxu0 0.0
        %2134 = vmatprep.subr.mxu0 0.0
        %2135 = vmatpush2.msra.mxu0 0.0
        %2136 = vmatprep.subr.mxu0 0.0
        %2137 = vmatpush2.msra.mxu0 0.0
        %2138 = vmatprep.subr.mxu0 0.0
        %2139 = vmatpush2.msra.mxu0 0.0
        %2140 = vmatprep.subr.mxu0 0.0
        %2141 = vmatpush2.msra.mxu0 0.0
        %2142 = vmatprep.subr.mxu0 0.0
        %2143 = vmatpush2.msra.mxu0 0.0
        %2144 = vmatprep.subr.mxu0 0.0
        %2145 = vmatpush2.msra.mxu0 0.0
        %2146 = vmatprep.subr.mxu0 0.0
        %2147 = vmatpush2.msra.mxu0 0.0
        %2148 = vmatprep.subr.mxu0 0.0
        %2149 = vmatpush2.msra.mxu0 0.0
        %2150 = vmatprep.subr.mxu0 0.0
        %2151 = vmatpush2.msra.mxu0 0.0
        %2152 = vmatprep.subr.mxu0 0.0
        %2153 = vmatpush2.msra.mxu0 0.0
        %2154 = vmatprep.subr.mxu0 0.0
        %2155 = vmatpush2.msra.mxu0 0.0
        %2156 = vmatprep.subr.mxu0 0.0
        %2157 = vmatpush2.msra.mxu0 0.0
        %2158 = vmatprep.subr.mxu0 0.0
        %2159 = vmatpush2.msra.mxu0 0.0
        %2160 = vmatprep.subr.mxu0 0.0
        %2161 = vmatpush2.msra.mxu0 0.0
        %2162 = vmatprep.mubr.f32.mxu0 0.0
        %2163 = vmatmul.mubr.f32.gmra.mxu0 %v2089
        %v2164 = vpop.f32.mrf.mxu0
        %v2165 = vadd.f32 0.0, %v2164
        %v2166 = vpop.f32.mrf.mxu0
        %v2167 = vadd.f32 0.0, %v2166
        %2168 = vdwg.mxu0
        %2169 = vmatprep.subr.mxu0 %v1910
        %2170 = vmatpush1.msra.mxu0 %v1909
        %2171 = vmatprep.subr.mxu0 %v1906
        %2172 = vmatpush1.msra.mxu0 %v1905
        %2173 = vmatprep.subr.mxu0 %v1902
        %2174 = vmatpush1.msra.mxu0 %v1901
        %2175 = vmatprep.subr.mxu0 %v1898
        %2176 = vmatpush1.msra.mxu0 %v1897
        %2177 = vmatprep.subr.mxu0 %v1894
        %2178 = vmatpush1.msra.mxu0 %v1893
        %2179 = vmatprep.subr.mxu0 %v1890
        %2180 = vmatpush1.msra.mxu0 %v1889
        %2181 = vmatprep.subr.mxu0 %v1886
        %2182 = vmatpush1.msra.mxu0 %v1885
        %2183 = vmatprep.subr.mxu0 %v1882
        %2184 = vmatpush1.msra.mxu0 %v1881
        %2185 = vmatprep.subr.mxu0 %v1878
        %2186 = vmatpush1.msra.mxu0 %v1877
        %2187 = vmatprep.subr.mxu0 %v1874
        %2188 = vmatpush1.msra.mxu0 %v1873
        %2189 = vmatprep.subr.mxu0 %v1870
        %2190 = vmatpush1.msra.mxu0 %v1869
        %2191 = vmatprep.subr.mxu0 %v1866
        %2192 = vmatpush1.msra.mxu0 %v1865
        %2193 = vmatprep.subr.mxu0 %v1862
        %2194 = vmatpush1.msra.mxu0 %v1861
        %2195 = vmatprep.subr.mxu0 %v1858
        %2196 = vmatpush1.msra.mxu0 %v1857
        %2197 = vmatprep.subr.mxu0 %v1854
        %2198 = vmatpush1.msra.mxu0 %v1853
        %2199 = vmatprep.subr.mxu0 %v1850
        %2200 = vmatpush1.msra.mxu0 %v1849
        %2201 = vmatprep.subr.mxu0 0.0
        %2202 = vmatpush2.msra.mxu0 0.0
        %2203 = vmatprep.subr.mxu0 0.0
        %2204 = vmatpush2.msra.mxu0 0.0
        %2205 = vmatprep.subr.mxu0 0.0
        %2206 = vmatpush2.msra.mxu0 0.0
        %2207 = vmatprep.subr.mxu0 0.0
        %2208 = vmatpush2.msra.mxu0 0.0
        %2209 = vmatprep.subr.mxu0 0.0
        %2210 = vmatpush2.msra.mxu0 0.0
        %2211 = vmatprep.subr.mxu0 0.0
        %2212 = vmatpush2.msra.mxu0 0.0
        %2213 = vmatprep.subr.mxu0 0.0
        %2214 = vmatpush2.msra.mxu0 0.0
        %2215 = vmatprep.subr.mxu0 0.0
        %2216 = vmatpush2.msra.mxu0 0.0
        %2217 = vmatprep.subr.mxu0 0.0
        %2218 = vmatpush2.msra.mxu0 0.0
        %2219 = vmatprep.subr.mxu0 0.0
        %2220 = vmatpush2.msra.mxu0 0.0
        %2221 = vmatprep.subr.mxu0 0.0
        %2222 = vmatpush2.msra.mxu0 0.0
        %2223 = vmatprep.subr.mxu0 0.0
        %2224 = vmatpush2.msra.mxu0 0.0
        %2225 = vmatprep.subr.mxu0 0.0
        %2226 = vmatpush2.msra.mxu0 0.0
        %2227 = vmatprep.subr.mxu0 0.0
        %2228 = vmatpush2.msra.mxu0 0.0
        %2229 = vmatprep.subr.mxu0 0.0
        %2230 = vmatpush2.msra.mxu0 0.0
        %2231 = vmatprep.subr.mxu0 0.0
        %2232 = vmatpush2.msra.mxu0 0.0
        %2233 = vmatprep.mubr.f32.mxu0 0.0
        %2234 = vmatmul.mubr.f32.gmra.mxu0 %v2089
        %v2235 = vpop.f32.mrf.mxu0
        %v2236 = vadd.f32 0.0, %v2235
        %v2237 = vpop.f32.mrf.mxu0
        %v2238 = vadd.f32 0.0, %v2237
        %2239 = vdwg.mxu0
        %v2240 = vadd.f32 %v2094, %v2165
        %v2241 = vadd.f32 %v2095, %v2167
        %v2242 = vadd.f32 %v2096, %v2236
        %v2243 = vadd.f32 %v2097, %v2238
        %v2244 = vxor.u32 %v2240, 2147483648
        %v2245 = vmul.f32 %v2244, 1.442695
        %v2246 = vpow.pop %v2245
        %v2247 = vadd.f32 %v2246, 1.0
        %v2248 = vrcp.pop %v2247
        %v2249 = vmul.f32 1.0, %v2248
        %v2250 = vxor.u32 %v2241, 2147483648
        %v2251 = vmul.f32 %v2250, 1.442695
        %v2252 = vpow.pop %v2251
        %v2253 = vadd.f32 %v2252, 1.0
        %v2254 = vrcp.pop %v2253
        %v2255 = vmul.f32 1.0, %v2254
        %v2256 = vtanh.pop %v2242
        %v2257 = vxor.u32 %v2243, 2147483648
        %v2258 = vmul.f32 %v2257, 1.442695
        %v2259 = vpow.pop %v2258
        %v2260 = vadd.f32 %v2259, 1.0
        %v2261 = vrcp.pop %v2260
        %v2262 = vmul.f32 1.0, %v2261
        %v2263 = vmul.f32 %v2255, %v2087
        %v2264 = vmul.f32 %v2249, %v2256
        %v2265 = vadd.f32 %v2263, %v2264
        %v2266 = vtanh.pop %v2265
        %v2267 = vmul.f32 %v2262, %v2266
        %s2268 = scalar_lea.vmem %s258, 8 [#allocation13]
        %2269 = vst [vmem:[%s2268] sm:$0xff] %v2267
        %s2270 = smul.u32 2, 4
        %s2271 = smul.addr %s2270, 8
        %s2272 = scalar_lea.vmem [#allocation2], %s2271
        %v2273 = vld [vmem:[%s2272] sm:$0xff]
        %v2274 = vld [vmem:[%s2272 + $0x8] sm:$0xff]
        %v2275 = vld [vmem:[%s2272 + $0x10] sm:$0xff]
        %v2276 = vld [vmem:[%s2272 + $0x18] sm:$0xff]
        %2277 = vmatprep.subr.mxu0 %v1908
        %2278 = vmatpush1.msra.mxu0 %v1907
        %2279 = vmatprep.subr.mxu0 %v1904
        %2280 = vmatpush1.msra.mxu0 %v1903
        %2281 = vmatprep.subr.mxu0 %v1900
        %2282 = vmatpush1.msra.mxu0 %v1899
        %2283 = vmatprep.subr.mxu0 %v1896
        %2284 = vmatpush1.msra.mxu0 %v1895
        %2285 = vmatprep.subr.mxu0 %v1892
        %2286 = vmatpush1.msra.mxu0 %v1891
        %2287 = vmatprep.subr.mxu0 %v1888
        %2288 = vmatpush1.msra.mxu0 %v1887
        %2289 = vmatprep.subr.mxu0 %v1884
        %2290 = vmatpush1.msra.mxu0 %v1883
        %2291 = vmatprep.subr.mxu0 %v1880
        %2292 = vmatpush1.msra.mxu0 %v1879
        %2293 = vmatprep.subr.mxu0 %v1876
        %2294 = vmatpush1.msra.mxu0 %v1875
        %2295 = vmatprep.subr.mxu0 %v1872
        %2296 = vmatpush1.msra.mxu0 %v1871
        %2297 = vmatprep.subr.mxu0 %v1868
        %2298 = vmatpush1.msra.mxu0 %v1867
        %2299 = vmatprep.subr.mxu0 %v1864
        %2300 = vmatpush1.msra.mxu0 %v1863
        %2301 = vmatprep.subr.mxu0 %v1860
        %2302 = vmatpush1.msra.mxu0 %v1859
        %2303 = vmatprep.subr.mxu0 %v1856
        %2304 = vmatpush1.msra.mxu0 %v1855
        %2305 = vmatprep.subr.mxu0 %v1852
        %2306 = vmatpush1.msra.mxu0 %v1851
        %2307 = vmatprep.subr.mxu0 %v1848
        %2308 = vmatpush1.msra.mxu0 %v1847
        %2309 = vmatprep.subr.mxu0 0.0
        %2310 = vmatpush2.msra.mxu0 0.0
        %2311 = vmatprep.subr.mxu0 0.0
        %2312 = vmatpush2.msra.mxu0 0.0
        %2313 = vmatprep.subr.mxu0 0.0
        %2314 = vmatpush2.msra.mxu0 0.0
        %2315 = vmatprep.subr.mxu0 0.0
        %2316 = vmatpush2.msra.mxu0 0.0
        %2317 = vmatprep.subr.mxu0 0.0
        %2318 = vmatpush2.msra.mxu0 0.0
        %2319 = vmatprep.subr.mxu0 0.0
        %2320 = vmatpush2.msra.mxu0 0.0
        %2321 = vmatprep.subr.mxu0 0.0
        %2322 = vmatpush2.msra.mxu0 0.0
        %2323 = vmatprep.subr.mxu0 0.0
        %2324 = vmatpush2.msra.mxu0 0.0
        %2325 = vmatprep.subr.mxu0 0.0
        %2326 = vmatpush2.msra.mxu0 0.0
        %2327 = vmatprep.subr.mxu0 0.0
        %2328 = vmatpush2.msra.mxu0 0.0
        %2329 = vmatprep.subr.mxu0 0.0
        %2330 = vmatpush2.msra.mxu0 0.0
        %2331 = vmatprep.subr.mxu0 0.0
        %2332 = vmatpush2.msra.mxu0 0.0
        %2333 = vmatprep.subr.mxu0 0.0
        %2334 = vmatpush2.msra.mxu0 0.0
        %2335 = vmatprep.subr.mxu0 0.0
        %2336 = vmatpush2.msra.mxu0 0.0
        %2337 = vmatprep.subr.mxu0 0.0
        %2338 = vmatpush2.msra.mxu0 0.0
        %2339 = vmatprep.subr.mxu0 0.0
        %2340 = vmatpush2.msra.mxu0 0.0
        %2341 = vmatprep.mubr.f32.mxu0 0.0
        %2342 = vmatmul.mubr.f32.gmra.mxu0 %v2267
        %v2343 = vpop.f32.mrf.mxu0
        %v2344 = vadd.f32 0.0, %v2343
        %v2345 = vpop.f32.mrf.mxu0
        %v2346 = vadd.f32 0.0, %v2345
        %2347 = vdwg.mxu0
        %2348 = vmatprep.subr.mxu0 %v1910
        %2349 = vmatpush1.msra.mxu0 %v1909
        %2350 = vmatprep.subr.mxu0 %v1906
        %2351 = vmatpush1.msra.mxu0 %v1905
        %2352 = vmatprep.subr.mxu0 %v1902
        %2353 = vmatpush1.msra.mxu0 %v1901
        %2354 = vmatprep.subr.mxu0 %v1898
        %2355 = vmatpush1.msra.mxu0 %v1897
        %2356 = vmatprep.subr.mxu0 %v1894
        %2357 = vmatpush1.msra.mxu0 %v1893
        %2358 = vmatprep.subr.mxu0 %v1890
        %2359 = vmatpush1.msra.mxu0 %v1889
        %2360 = vmatprep.subr.mxu0 %v1886
        %2361 = vmatpush1.msra.mxu0 %v1885
        %2362 = vmatprep.subr.mxu0 %v1882
        %2363 = vmatpush1.msra.mxu0 %v1881
        %2364 = vmatprep.subr.mxu0 %v1878
        %2365 = vmatpush1.msra.mxu0 %v1877
        %2366 = vmatprep.subr.mxu0 %v1874
        %2367 = vmatpush1.msra.mxu0 %v1873
        %2368 = vmatprep.subr.mxu0 %v1870
        %2369 = vmatpush1.msra.mxu0 %v1869
        %2370 = vmatprep.subr.mxu0 %v1866
        %2371 = vmatpush1.msra.mxu0 %v1865
        %2372 = vmatprep.subr.mxu0 %v1862
        %2373 = vmatpush1.msra.mxu0 %v1861
        %2374 = vmatprep.subr.mxu0 %v1858
        %2375 = vmatpush1.msra.mxu0 %v1857
        %2376 = vmatprep.subr.mxu0 %v1854
        %2377 = vmatpush1.msra.mxu0 %v1853
        %2378 = vmatprep.subr.mxu0 %v1850
        %2379 = vmatpush1.msra.mxu0 %v1849
        %2380 = vmatprep.subr.mxu0 0.0
        %2381 = vmatpush2.msra.mxu0 0.0
        %2382 = vmatprep.subr.mxu0 0.0
        %2383 = vmatpush2.msra.mxu0 0.0
        %2384 = vmatprep.subr.mxu0 0.0
        %2385 = vmatpush2.msra.mxu0 0.0
        %2386 = vmatprep.subr.mxu0 0.0
        %2387 = vmatpush2.msra.mxu0 0.0
        %2388 = vmatprep.subr.mxu0 0.0
        %2389 = vmatpush2.msra.mxu0 0.0
        %2390 = vmatprep.subr.mxu0 0.0
        %2391 = vmatpush2.msra.mxu0 0.0
        %2392 = vmatprep.subr.mxu0 0.0
        %2393 = vmatpush2.msra.mxu0 0.0
        %2394 = vmatprep.subr.mxu0 0.0
        %2395 = vmatpush2.msra.mxu0 0.0
        %2396 = vmatprep.subr.mxu0 0.0
        %2397 = vmatpush2.msra.mxu0 0.0
        %2398 = vmatprep.subr.mxu0 0.0
        %2399 = vmatpush2.msra.mxu0 0.0
        %2400 = vmatprep.subr.mxu0 0.0
        %2401 = vmatpush2.msra.mxu0 0.0
        %2402 = vmatprep.subr.mxu0 0.0
        %2403 = vmatpush2.msra.mxu0 0.0
        %2404 = vmatprep.subr.mxu0 0.0
        %2405 = vmatpush2.msra.mxu0 0.0
        %2406 = vmatprep.subr.mxu0 0.0
        %2407 = vmatpush2.msra.mxu0 0.0
        %2408 = vmatprep.subr.mxu0 0.0
        %2409 = vmatpush2.msra.mxu0 0.0
        %2410 = vmatprep.subr.mxu0 0.0
        %2411 = vmatpush2.msra.mxu0 0.0
        %2412 = vmatprep.mubr.f32.mxu0 0.0
        %2413 = vmatmul.mubr.f32.gmra.mxu0 %v2267
        %v2414 = vpop.f32.mrf.mxu0
        %v2415 = vadd.f32 0.0, %v2414
        %v2416 = vpop.f32.mrf.mxu0
        %v2417 = vadd.f32 0.0, %v2416
        %2418 = vdwg.mxu0
        %v2419 = vadd.f32 %v2273, %v2344
        %v2420 = vadd.f32 %v2274, %v2346
        %v2421 = vadd.f32 %v2275, %v2415
        %v2422 = vadd.f32 %v2276, %v2417
        %v2423 = vxor.u32 %v2419, 2147483648
        %v2424 = vmul.f32 %v2423, 1.442695
        %v2425 = vpow.pop %v2424
        %v2426 = vadd.f32 %v2425, 1.0
        %v2427 = vrcp.pop %v2426
        %v2428 = vmul.f32 1.0, %v2427
        %v2429 = vxor.u32 %v2420, 2147483648
        %v2430 = vmul.f32 %v2429, 1.442695
        %v2431 = vpow.pop %v2430
        %v2432 = vadd.f32 %v2431, 1.0
        %v2433 = vrcp.pop %v2432
        %v2434 = vmul.f32 1.0, %v2433
        %v2435 = vtanh.pop %v2421
        %v2436 = vxor.u32 %v2422, 2147483648
        %v2437 = vmul.f32 %v2436, 1.442695
        %v2438 = vpow.pop %v2437
        %v2439 = vadd.f32 %v2438, 1.0
        %v2440 = vrcp.pop %v2439
        %v2441 = vmul.f32 1.0, %v2440
        %v2442 = vmul.f32 %v2434, %v2265
        %v2443 = vmul.f32 %v2428, %v2435
        %v2444 = vadd.f32 %v2442, %v2443
        %v2445 = vtanh.pop %v2444
        %v2446 = vmul.f32 %v2441, %v2445
        %s2447 = scalar_lea.vmem %s258, 16 [#allocation13]
        %2448 = vst [vmem:[%s2447] sm:$0xff] %v2446
        %s2449 = smul.u32 3, 4
        %s2450 = smul.addr %s2449, 8
        %s2451 = scalar_lea.vmem [#allocation2], %s2450
        %v2452 = vld [vmem:[%s2451] sm:$0xff]
        %v2453 = vld [vmem:[%s2451 + $0x8] sm:$0xff]
        %v2454 = vld [vmem:[%s2451 + $0x10] sm:$0xff]
        %v2455 = vld [vmem:[%s2451 + $0x18] sm:$0xff]
        %2456 = vmatprep.subr.mxu0 %v1908
        %2457 = vmatpush1.msra.mxu0 %v1907
        %2458 = vmatprep.subr.mxu0 %v1904
        %2459 = vmatpush1.msra.mxu0 %v1903
        %2460 = vmatprep.subr.mxu0 %v1900
        %2461 = vmatpush1.msra.mxu0 %v1899
        %2462 = vmatprep.subr.mxu0 %v1896
        %2463 = vmatpush1.msra.mxu0 %v1895
        %2464 = vmatprep.subr.mxu0 %v1892
        %2465 = vmatpush1.msra.mxu0 %v1891
        %2466 = vmatprep.subr.mxu0 %v1888
        %2467 = vmatpush1.msra.mxu0 %v1887
        %2468 = vmatprep.subr.mxu0 %v1884
        %2469 = vmatpush1.msra.mxu0 %v1883
        %2470 = vmatprep.subr.mxu0 %v1880
        %2471 = vmatpush1.msra.mxu0 %v1879
        %2472 = vmatprep.subr.mxu0 %v1876
        %2473 = vmatpush1.msra.mxu0 %v1875
        %2474 = vmatprep.subr.mxu0 %v1872
        %2475 = vmatpush1.msra.mxu0 %v1871
        %2476 = vmatprep.subr.mxu0 %v1868
        %2477 = vmatpush1.msra.mxu0 %v1867
        %2478 = vmatprep.subr.mxu0 %v1864
        %2479 = vmatpush1.msra.mxu0 %v1863
        %2480 = vmatprep.subr.mxu0 %v1860
        %2481 = vmatpush1.msra.mxu0 %v1859
        %2482 = vmatprep.subr.mxu0 %v1856
        %2483 = vmatpush1.msra.mxu0 %v1855
        %2484 = vmatprep.subr.mxu0 %v1852
        %2485 = vmatpush1.msra.mxu0 %v1851
        %2486 = vmatprep.subr.mxu0 %v1848
        %2487 = vmatpush1.msra.mxu0 %v1847
        %2488 = vmatprep.subr.mxu0 0.0
        %2489 = vmatpush2.msra.mxu0 0.0
        %2490 = vmatprep.subr.mxu0 0.0
        %2491 = vmatpush2.msra.mxu0 0.0
        %2492 = vmatprep.subr.mxu0 0.0
        %2493 = vmatpush2.msra.mxu0 0.0
        %2494 = vmatprep.subr.mxu0 0.0
        %2495 = vmatpush2.msra.mxu0 0.0
        %2496 = vmatprep.subr.mxu0 0.0
        %2497 = vmatpush2.msra.mxu0 0.0
        %2498 = vmatprep.subr.mxu0 0.0
        %2499 = vmatpush2.msra.mxu0 0.0
        %2500 = vmatprep.subr.mxu0 0.0
        %2501 = vmatpush2.msra.mxu0 0.0
        %2502 = vmatprep.subr.mxu0 0.0
        %2503 = vmatpush2.msra.mxu0 0.0
        %2504 = vmatprep.subr.mxu0 0.0
        %2505 = vmatpush2.msra.mxu0 0.0
        %2506 = vmatprep.subr.mxu0 0.0
        %2507 = vmatpush2.msra.mxu0 0.0
        %2508 = vmatprep.subr.mxu0 0.0
        %2509 = vmatpush2.msra.mxu0 0.0
        %2510 = vmatprep.subr.mxu0 0.0
        %2511 = vmatpush2.msra.mxu0 0.0
        %2512 = vmatprep.subr.mxu0 0.0
        %2513 = vmatpush2.msra.mxu0 0.0
        %2514 = vmatprep.subr.mxu0 0.0
        %2515 = vmatpush2.msra.mxu0 0.0
        %2516 = vmatprep.subr.mxu0 0.0
        %2517 = vmatpush2.msra.mxu0 0.0
        %2518 = vmatprep.subr.mxu0 0.0
        %2519 = vmatpush2.msra.mxu0 0.0
        %2520 = vmatprep.mubr.f32.mxu0 0.0
        %2521 = vmatmul.mubr.f32.gmra.mxu0 %v2446
        %v2522 = vpop.f32.mrf.mxu0
        %v2523 = vadd.f32 0.0, %v2522
        %v2524 = vpop.f32.mrf.mxu0
        %v2525 = vadd.f32 0.0, %v2524
        %2526 = vdwg.mxu0
        %2527 = vmatprep.subr.mxu0 %v1910
        %2528 = vmatpush1.msra.mxu0 %v1909
        %2529 = vmatprep.subr.mxu0 %v1906
        %2530 = vmatpush1.msra.mxu0 %v1905
        %2531 = vmatprep.subr.mxu0 %v1902
        %2532 = vmatpush1.msra.mxu0 %v1901
        %2533 = vmatprep.subr.mxu0 %v1898
        %2534 = vmatpush1.msra.mxu0 %v1897
        %2535 = vmatprep.subr.mxu0 %v1894
        %2536 = vmatpush1.msra.mxu0 %v1893
        %2537 = vmatprep.subr.mxu0 %v1890
        %2538 = vmatpush1.msra.mxu0 %v1889
        %2539 = vmatprep.subr.mxu0 %v1886
        %2540 = vmatpush1.msra.mxu0 %v1885
        %2541 = vmatprep.subr.mxu0 %v1882
        %2542 = vmatpush1.msra.mxu0 %v1881
        %2543 = vmatprep.subr.mxu0 %v1878
        %2544 = vmatpush1.msra.mxu0 %v1877
        %2545 = vmatprep.subr.mxu0 %v1874
        %2546 = vmatpush1.msra.mxu0 %v1873
        %2547 = vmatprep.subr.mxu0 %v1870
        %2548 = vmatpush1.msra.mxu0 %v1869
        %2549 = vmatprep.subr.mxu0 %v1866
        %2550 = vmatpush1.msra.mxu0 %v1865
        %2551 = vmatprep.subr.mxu0 %v1862
        %2552 = vmatpush1.msra.mxu0 %v1861
        %2553 = vmatprep.subr.mxu0 %v1858
        %2554 = vmatpush1.msra.mxu0 %v1857
        %2555 = vmatprep.subr.mxu0 %v1854
        %2556 = vmatpush1.msra.mxu0 %v1853
        %2557 = vmatprep.subr.mxu0 %v1850
        %2558 = vmatpush1.msra.mxu0 %v1849
        %2559 = vmatprep.subr.mxu0 0.0
        %2560 = vmatpush2.msra.mxu0 0.0
        %2561 = vmatprep.subr.mxu0 0.0
        %2562 = vmatpush2.msra.mxu0 0.0
        %2563 = vmatprep.subr.mxu0 0.0
        %2564 = vmatpush2.msra.mxu0 0.0
        %2565 = vmatprep.subr.mxu0 0.0
        %2566 = vmatpush2.msra.mxu0 0.0
        %2567 = vmatprep.subr.mxu0 0.0
        %2568 = vmatpush2.msra.mxu0 0.0
        %2569 = vmatprep.subr.mxu0 0.0
        %2570 = vmatpush2.msra.mxu0 0.0
        %2571 = vmatprep.subr.mxu0 0.0
        %2572 = vmatpush2.msra.mxu0 0.0
        %2573 = vmatprep.subr.mxu0 0.0
        %2574 = vmatpush2.msra.mxu0 0.0
        %2575 = vmatprep.subr.mxu0 0.0
        %2576 = vmatpush2.msra.mxu0 0.0
        %2577 = vmatprep.subr.mxu0 0.0
        %2578 = vmatpush2.msra.mxu0 0.0
        %2579 = vmatprep.subr.mxu0 0.0
        %2580 = vmatpush2.msra.mxu0 0.0
        %2581 = vmatprep.subr.mxu0 0.0
        %2582 = vmatpush2.msra.mxu0 0.0
        %2583 = vmatprep.subr.mxu0 0.0
        %2584 = vmatpush2.msra.mxu0 0.0
        %2585 = vmatprep.subr.mxu0 0.0
        %2586 = vmatpush2.msra.mxu0 0.0
        %2587 = vmatprep.subr.mxu0 0.0
        %2588 = vmatpush2.msra.mxu0 0.0
        %2589 = vmatprep.subr.mxu0 0.0
        %2590 = vmatpush2.msra.mxu0 0.0
        %2591 = vmatprep.mubr.f32.mxu0 0.0
        %2592 = vmatmul.mubr.f32.gmra.mxu0 %v2446
        %v2593 = vpop.f32.mrf.mxu0
        %v2594 = vadd.f32 0.0, %v2593
        %v2595 = vpop.f32.mrf.mxu0
        %v2596 = vadd.f32 0.0, %v2595
        %2597 = vdwg.mxu0
        %v2598 = vadd.f32 %v2452, %v2523
        %v2599 = vadd.f32 %v2453, %v2525
        %v2600 = vadd.f32 %v2454, %v2594
        %v2601 = vadd.f32 %v2455, %v2596
        %v2602 = vxor.u32 %v2598, 2147483648
        %v2603 = vmul.f32 %v2602, 1.442695
        %v2604 = vpow.pop %v2603
        %v2605 = vadd.f32 %v2604, 1.0
        %v2606 = vrcp.pop %v2605
        %v2607 = vmul.f32 1.0, %v2606
        %v2608 = vxor.u32 %v2599, 2147483648
        %v2609 = vmul.f32 %v2608, 1.442695
        %v2610 = vpow.pop %v2609
        %v2611 = vadd.f32 %v2610, 1.0
        %v2612 = vrcp.pop %v2611
        %v2613 = vmul.f32 1.0, %v2612
        %v2614 = vtanh.pop %v2600
        %v2615 = vxor.u32 %v2601, 2147483648
        %v2616 = vmul.f32 %v2615, 1.442695
        %v2617 = vpow.pop %v2616
        %v2618 = vadd.f32 %v2617, 1.0
        %v2619 = vrcp.pop %v2618
        %v2620 = vmul.f32 1.0, %v2619
        %v2621 = vmul.f32 %v2613, %v2444
        %v2622 = vmul.f32 %v2607, %v2614
        %v2623 = vadd.f32 %v2621, %v2622
        %v2624 = vtanh.pop %v2623
        %v2625 = vmul.f32 %v2620, %v2624
        %s2626 = scalar_lea.vmem %s258, 24 [#allocation13]
        %2627 = vst [vmem:[%s2626] sm:$0xff] %v2625
        %2628 = vst [vmem:[#allocation3] sm:$0xff] %v2625
        %2629 = vst [vmem:[#allocation4] sm:$0xff] %v2623
        %s2630 = sand.u32 %s120, 1
        %s2631 = scalar_lea.sflag [#allocation7], %s2630
        %s2632 = sand.u32 %s120, 1
        %s2633 = smul.addr %s2632, 32
        %s2634 = scalar_lea.vmem [#allocation13], %s2633
        // Predicated region
        $region57: #{tpu_custom_call.1} parent=35 // pred_check
          %p2635 = pneg %p130
        $region58: #{tpu_custom_call.1} parent=35 // pred_check_branch
          %2637 = sbr.rel (%p2635) target = $region60
        $region59: #{tpu_custom_call.1} parent=35 // pred_region
          %s2638 = smul.u32 4, %s23
          %s2640 = ssub.s32 512, 512
          %2641 = vsyncadd %s2631, %s2640
          %s2642 = smul.addr %s2638, 128
          %s2643 = scalar_lea.hbm %s4, %s2642
          %s2644 = sshll.u32 %s2634, 4
          %s2645 = int_to_ptr.vmem [resolvable:$true] %s2644
          %2650 = dma.vmem_to_hbm [thread:$0]  %s2645, 512, %s2643, %s2631, 128, 128, 8
        $region60: #{tpu_custom_call.1} parent=35 // pred_fallthru
          _
      $region36: #{tpu_custom_call.1} parent=5 // pred_fallthru
        _
      %p2651 = scmp.le.s32.totalorder 2, %s18
      // Predicated region
      $region61: #{tpu_custom_call.1} parent=5 // pred_check
        %p2652 = pneg %p2651
      $region62: #{tpu_custom_call.1} parent=5 // pred_check_branch
        %2654 = sbr.rel (%p2652) target = $region64
      $region63: #{tpu_custom_call.1} parent=5 // pred_region
        %s2655 = ssub.s32 %s18, 2
        // Predicated region
        $region65: #{tpu_custom_call.1} parent=63 // pred_check
          %p2656 = pneg %p136
        $region66: #{tpu_custom_call.1} parent=63 // pred_check_branch
          %2658 = sbr.rel (%p2656) target = $region68
        $region67: #{tpu_custom_call.1} parent=63 // pred_region
          %s2659 = sand.u32 %s121, 1
          %s2660 = scalar_lea.sflag [#allocation7], %s2659
          %s2661 = sand.u32 %s121, 1
          %s2662 = smul.addr %s2661, 32
          %s2663 = scalar_lea.vmem [#allocation13], %s2662
          %2664 = dma.done %s2660, 512
        $region68: #{tpu_custom_call.1} parent=63 // pred_fallthru
          _
      $region64: #{tpu_custom_call.1} parent=5 // pred_fallthru
        _
    $region6: #{tpu_custom_call.1} parent=1 // loop_footer
      %s22 = sadd.s32 1, %s18
    $region7: #{tpu_custom_call.1} parent=1 // loop_footer_branch
      %17 = sbr.rel target = $region3
    $region8: #{tpu_custom_call.1} parent=1 // loop_exit
      _
    %2665 = vsyncpa [#allocation6], 1
    %s2666 = scalar_lea.sflag [#allocation6], 1
    %2667 = vsyncpa %s2666, 1
    %2668 = vsyncpa [#allocation9], 1
    %2669 = vsyncpa [#allocation12], 1
    %2670 = vsyncpa [#allocation7], 1
    %s2671 = scalar_lea.sflag [#allocation7], 1
    %2672 = vsyncpa %s2671, 1

</llo_original>
